<compile_context>
chip_gen: v6e
topology: v6e:2x2x1
jax: 0.10.0
libtpu: 0.0.40
codegen_flags: <defaults>
</compile_context>

<pallas_src>
import functools

import jax
import jax.numpy as jnp
from jax.experimental import pallas as pl
from jax.experimental.pallas import tpu as pltpu


def _spatial_attn_kernel(w_ref, b_ref, x_ref, o_ref, pavg_ref, pmax_ref, *,
                         k, pad, C, H, W, HW, HWp, Bt, init_once):
    """One grid step processes Bt batch elements.

    w_ref   : SMEM (2*k*k,) f32   conv weights flattened as [in_ch, kh, kw]
    b_ref   : SMEM (1,)     f32   conv bias
    x_ref   : VMEM (Bt, C, HWp)   input block (lane-dense, HWp % 128 == 0)
    o_ref   : VMEM (Bt, C, HWp)   output block
    pavg_ref: VMEM (Bt, Hp, Wp) f32  zero-padded channel-mean map (persistent)
    pmax_ref: VMEM (Bt, Hp, Wp) f32  zero-padded channel-max  map (persistent)
    """
    Hp, Wp = H + 2 * pad, W + 2 * pad

    # ---- channel mean / max without a full-block f32 temporary -------------
    # Per-channel slices are upcast one at a time (two partial sums break the
    # serial add chain); avoids keeping an f32 copy of the whole (Bt, C, HWp)
    # block live across the conv, which frees VMEM/vregs for bigger blocks.
    x0 = x_ref[:, 0, :].astype(jnp.float32)              # (Bt, HWp)
    s0, s1 = x0, jnp.zeros_like(x0)
    mx = x0
    for c in range(1, C):
        xc = x_ref[:, c, :].astype(jnp.float32)
        if c % 2 == 0:
            s0 = s0 + xc
        else:
            s1 = s1 + xc
        mx = jnp.maximum(mx, xc)
    avg = (s0 + s1) * jnp.float32(1.0 / C)               # (Bt, HWp)

    # ---- zero-padded conv-input maps in persistent VMEM scratch ------------
    if pad > 0:
        if init_once:
            # Single-TensorCore chip, "arbitrary" grid axis: step 0 runs
            # first; the pad ring stays zero afterwards because later steps
            # only rewrite the interior.
            @pl.when(pl.program_id(0) == 0)
            def _():
                pavg_ref[...] = jnp.zeros((Bt, Hp, Wp), jnp.float32)
                pmax_ref[...] = jnp.zeros((Bt, Hp, Wp), jnp.float32)
        else:
            # Multi-TensorCore chip with a "parallel" grid axis: a core may
            # never execute grid step 0, so gating on program_id==0 could
            # leave its (per-core) scratch ring uninitialized.  Zero just the
            # thin pad ring every step; the interior is overwritten below.
            zrow = jnp.zeros((Bt, pad, Wp), jnp.float32)
            zcol = jnp.zeros((Bt, H, pad), jnp.float32)
            for ref in (pavg_ref, pmax_ref):
                ref[:, pl.ds(0, pad), :] = zrow
                ref[:, pl.ds(H + pad, pad), :] = zrow
                ref[:, pl.ds(pad, H), pl.ds(0, pad)] = zcol
                ref[:, pl.ds(pad, H), pl.ds(W + pad, pad)] = zcol

    pavg_ref[:, pl.ds(pad, H), pl.ds(pad, W)] = avg[:, :HW].reshape(Bt, H, W)
    pmax_ref[:, pl.ds(pad, H), pl.ds(pad, W)] = mx[:, :HW].reshape(Bt, H, W)

    # ---- hoist all conv-weight scalar reads out of the tap loop ------------
    w_avg = [[w_ref[ki * k + kj] for kj in range(k)] for ki in range(k)]
    w_max = [[w_ref[k * k + ki * k + kj] for kj in range(k)] for ki in range(k)]

    # ---- k*k shifted MACs, 4 independent accumulators for VALU ILP ---------
    # TODO(synk): for large H*W, switch to lane-dense (128-padded) maps and
    # pltpu.roll so the kj shifts run on the XLU instead of 2*k*k
    # lane-misaligned window loads (minor at 16x16 per the review).
    accs = [jnp.zeros((Bt, H, W), jnp.float32) for _ in range(4)]
    for ki in range(k):
        a = 2 * (ki % 2)
        for kj in range(k):
            win_a = pavg_ref[:, pl.ds(ki, H), pl.ds(kj, W)]
            win_m = pmax_ref[:, pl.ds(ki, H), pl.ds(kj, W)]
            accs[a] = accs[a] + w_avg[ki][kj] * win_a
            accs[a + 1] = accs[a + 1] + w_max[ki][kj] * win_m

    conv = (accs[0] + accs[1]) + (accs[2] + accs[3]) + b_ref[0]
    mask = jax.nn.sigmoid(conv).reshape(Bt, HW)           # (Bt, HW) f32
    if HWp != HW:
        # Padded lanes of x are zero, so any mask value is fine there.
        mask = jnp.concatenate(
            [mask, jnp.zeros((Bt, HWp - HW), jnp.float32)], axis=-1)

    # ---- lane-dense apply & store in the input dtype ------------------------
    # The tiny mask is cast once; the full block is multiplied in its native
    # dtype (bf16 stays bf16 on v6e/v7x -> no full-block upcast/downcast).
    o_ref[...] = x_ref[...] * mask.reshape(Bt, 1, HWp).astype(o_ref.dtype)


def _tpu_vmem_and_cores():
    """Best-effort (VMEM bytes per TensorCore, TensorCores per chip)."""
    vmem_cap = None
    try:
        info = pltpu.get_tpu_info()
        vmem_cap = int(getattr(info, "vmem_capacity_bytes", 0)) or None
    except Exception:
        vmem_cap = None
    if vmem_cap is None:
        vmem_cap = 64 * 1024 * 1024            # conservative modern default
    # v7x signature: 64 MiB VMEM per TensorCore and 2 TCs sharing the chip.
    num_tc = 2 if vmem_cap <= 64 * 1024 * 1024 else 1
    return vmem_cap, num_tc


def spatial_attention(x, weight, bias, kernel_size):
    """x: (B, C, H, W); weight: (1, 2, k, k); bias: (1,). Returns x.dtype."""
    assert kernel_size % 2 == 1
    B, C, H, W = x.shape
    pad = (kernel_size - 1) // 2
    HW = H * W
    HWp = ((HW + 127) // 128) * 128            # lane-dense flattened spatial

    # Lane-dense layout for HBM<->VMEM transfers; pad the flattened HW axis to
    # a multiple of 128 so output stores are unmasked full-lane vst.
    x_flat = x.reshape(B, C, HW)
    if HWp != HW:
        x_flat = jnp.pad(x_flat, ((0, 0), (0, 0), (0, HWp - HW)))
    w_flat = weight.reshape(-1).astype(jnp.float32)       # (2*k*k,)
    b_flat = bias.reshape(1).astype(jnp.float32)

    # ---- generation-aware block sizing (HBM-bandwidth-bound op:
    # multi-MiB blocks are needed to approach the HBM roofline) -------------
    vmem_cap, num_tc = _tpu_vmem_and_cores()
    if vmem_cap <= 64 * 1024 * 1024:           # v7x-class: 64 MiB VMEM / TC
        block_budget = 6 * 1024 * 1024
        base_limit = 48 * 1024 * 1024
    else:                                       # v5e / v6e: 128 MiB VMEM
        block_budget = 12 * 1024 * 1024
        base_limit = 64 * 1024 * 1024
    block_budget = min(block_budget, vmem_cap // 8)

    itemsize = jnp.dtype(x.dtype).itemsize
    bytes_per_batch = C * HWp * itemsize
    divisors = [d for d in range(1, B + 1) if B % d == 0]
    fitting = [d for d in divisors if d * bytes_per_batch <= block_budget]
    if not fitting:
        # TODO(synk): add a C-tiled two-pass path (running sum/max over C tiles
        # on an "arbitrary" axis, then apply) for shapes where a single batch
        # element exceeds the block budget.
        fitting = [1]
    if num_tc > 1:
        # Prefer a step count that splits evenly across TensorCores.
        even = [d for d in fitting if (B // d) % num_tc == 0]
        Bt = max(even) if even else max(fitting)
    else:
        # Single TensorCore: one big block per step pipelines best; no reason
        # to reserve extra grid steps.
        Bt = max(fitting)
    grid = (B // Bt,)

    Hp, Wp = H + 2 * pad, W + 2 * pad
    block_bytes = Bt * bytes_per_batch
    scratch_bytes = 2 * Bt * Hp * Wp * 4
    # in + out blocks double-buffered + scratch + in-kernel f32 temporaries.
    needed = 4 * block_bytes + scratch_bytes + 4 * 1024 * 1024
    vmem_limit = int(min(max(base_limit, needed), (vmem_cap * 3) // 4))

    init_once = num_tc == 1                     # safe to gate zero-fill on step 0
    dim_sem = ("arbitrary",) if init_once else ("parallel",)

    kernel = functools.partial(
        _spatial_attn_kernel, k=kernel_size, pad=pad, C=C, H=H, W=W,
        HW=HW, HWp=HWp, Bt=Bt, init_once=init_once)

    out_flat = pl.pallas_call(
        kernel,
        out_shape=jax.ShapeDtypeStruct((B, C, HWp), x.dtype),
        grid_spec=pltpu.PrefetchScalarGridSpec(
            num_scalar_prefetch=2,              # conv weights + bias -> SMEM once
            grid=grid,
            in_specs=[pl.BlockSpec((Bt, C, HWp), lambda g, w, b: (g, 0, 0))],
            out_specs=pl.BlockSpec((Bt, C, HWp), lambda g, w, b: (g, 0, 0)),
            scratch_shapes=[
                pltpu.VMEM((Bt, Hp, Wp), jnp.float32),
                pltpu.VMEM((Bt, Hp, Wp), jnp.float32),
            ]),
        compiler_params=pltpu.CompilerParams(
            dimension_semantics=dim_sem,
            vmem_limit_bytes=vmem_limit),
    )(w_flat, b_flat, x_flat)

    out = out_flat[:, :, :HW] if HWp != HW else out_flat
    return out.reshape(B, C, H, W)


def _reference(x, weight, bias):
    """Pure-JAX reference matching the PyTorch forward."""
    avg = jnp.mean(x, axis=1, keepdims=True)
    mx = jnp.max(x, axis=1, keepdims=True)
    mask_in = jnp.concatenate([avg, mx], axis=1)          # (B, 2, H, W)
    k = weight.shape[-1]
    pad = (k - 1) // 2
    conv = jax.lax.conv_general_dilated(
        mask_in, weight, window_strides=(1, 1),
        padding=[(pad, pad), (pad, pad)],
        dimension_numbers=("NCHW", "OIHW", "NCHW"))
    mask = jax.nn.sigmoid(conv + bias.reshape(1, 1, 1, 1))
    return x * mask


if __name__ == "__main__":
    B, C, H, W = 2, 4, 16, 16
    kernel_size = 7

    key = jax.random.PRNGKey(0)
    kx, kw, kb = jax.random.split(key, 3)
    x = jax.random.normal(kx, (B, C, H, W), dtype=jnp.float32)
    # Conv2d(2, 1, k) -> weight (1, 2, k, k), bias (1,)
    weight = 0.1 * jax.random.normal(kw, (1, 2, kernel_size, kernel_size),
                                     dtype=jnp.float32)
    bias = 0.05 * jax.random.normal(kb, (1,), dtype=jnp.float32)

    out = spatial_attention(x, weight, bias, kernel_size)
    out = jax.block_until_ready(out)

    ref = _reference(x, weight, bias)
    assert out.shape == (B, C, H, W)
    assert out.dtype == x.dtype
    assert jnp.allclose(out, ref, atol=1e-5, rtol=1e-5), (
        float(jnp.max(jnp.abs(out - ref))))

    print("KERNEL_OK")
</pallas_src>

<mosaic_0001>
module attributes {stable_mosaic.version = 11 : i64} {
  func.func @_spatial_attn_kernel(%arg0: i32, %arg1: memref<98xf32, #tpu.memory_space<smem>>, %arg2: memref<1xf32, #tpu.memory_space<smem>>, %arg3: memref<1x4x256xf32, #tpu.memory_space<vmem>>, %arg4: memref<1x4x256xf32, #tpu.memory_space<vmem>>, %arg5: memref<1x22x22xf32, #tpu.memory_space<vmem>>, %arg6: memref<1x22x22xf32, #tpu.memory_space<vmem>>) attributes {dimension_semantics = [#tpu.dimension_semantics<parallel>], iteration_bounds = array<i64: 2>, scalar_prefetch = 2 : i64, scratch_operands = 2 : i64, tpu.core_type = #tpu.core_type<tc>, window_params = [{transform_indices = @transform_0, window_bounds = array<i64: 1, 4, 256>}, {transform_indices = @transform_1, window_bounds = array<i64: 1, 4, 256>}]} {
    %c0 = arith.constant 0 : index
    %c0_0 = arith.constant 0 : index
    %c0_1 = arith.constant 0 : index
    %0 = vector.load %arg3[%c0, %c0_0, %c0_1] : memref<1x4x256xf32, #tpu.memory_space<vmem>>, vector<1x1x256xf32>
    %1 = vector.shape_cast %0 : vector<1x1x256xf32> to vector<1x256xf32>
    %cst = arith.constant 0.000000e+00 : f32
    %2 = vector.broadcast %cst : f32 to vector<1x256xf32>
    %c0_2 = arith.constant 0 : index
    %c1 = arith.constant 1 : index
    %c0_3 = arith.constant 0 : index
    %3 = vector.load %arg3[%c0_2, %c1, %c0_3] : memref<1x4x256xf32, #tpu.memory_space<vmem>>, vector<1x1x256xf32>
    %4 = vector.shape_cast %3 : vector<1x1x256xf32> to vector<1x256xf32>
    %5 = arith.addf %2, %4 : vector<1x256xf32>
    %6 = arith.maximumf %1, %4 : vector<1x256xf32>
    %c0_4 = arith.constant 0 : index
    %c2 = arith.constant 2 : index
    %c0_5 = arith.constant 0 : index
    %7 = vector.load %arg3[%c0_4, %c2, %c0_5] : memref<1x4x256xf32, #tpu.memory_space<vmem>>, vector<1x1x256xf32>
    %8 = vector.shape_cast %7 : vector<1x1x256xf32> to vector<1x256xf32>
    %9 = arith.addf %1, %8 : vector<1x256xf32>
    %10 = arith.maximumf %6, %8 : vector<1x256xf32>
    %c0_6 = arith.constant 0 : index
    %c3 = arith.constant 3 : index
    %c0_7 = arith.constant 0 : index
    %11 = vector.load %arg3[%c0_6, %c3, %c0_7] : memref<1x4x256xf32, #tpu.memory_space<vmem>>, vector<1x1x256xf32>
    %12 = vector.shape_cast %11 : vector<1x1x256xf32> to vector<1x256xf32>
    %13 = arith.addf %5, %12 : vector<1x256xf32>
    %14 = arith.maximumf %10, %12 : vector<1x256xf32>
    %15 = arith.addf %9, %13 : vector<1x256xf32>
    %cst_8 = arith.constant 2.500000e-01 : f32
    %16 = vector.broadcast %cst_8 : f32 to vector<1x256xf32>
    %17 = arith.mulf %15, %16 : vector<1x256xf32>
    %cst_9 = arith.constant 0.000000e+00 : f32
    %18 = vector.broadcast %cst_9 : f32 to vector<1x3x22xf32>
    %cst_10 = arith.constant 0.000000e+00 : f32
    %19 = vector.broadcast %cst_10 : f32 to vector<1x16x3xf32>
    %c0_11 = arith.constant 0 : index
    %c0_12 = arith.constant 0 : index
    %c0_13 = arith.constant 0 : index
    %20 = vector.load %arg5[%c0_11, %c0_12, %c0_13] : memref<1x22x22xf32, #tpu.memory_space<vmem>>, vector<1x3x22xf32>
    tpu.vector_store %arg5[%c0_11, %c0_12, %c0_13], %18 {strides = array<i32>} : memref<1x22x22xf32, #tpu.memory_space<vmem>>, vector<1x3x22xf32>,
    %c0_14 = arith.constant 0 : index
    %c19 = arith.constant 19 : index
    %c0_15 = arith.constant 0 : index
    %21 = vector.load %arg5[%c0_14, %c19, %c0_15] : memref<1x22x22xf32, #tpu.memory_space<vmem>>, vector<1x3x22xf32>
    tpu.vector_store %arg5[%c0_14, %c19, %c0_15], %18 {strides = array<i32>} : memref<1x22x22xf32, #tpu.memory_space<vmem>>, vector<1x3x22xf32>,
    %c0_16 = arith.constant 0 : index
    %c3_17 = arith.constant 3 : index
    %c0_18 = arith.constant 0 : index
    %22 = vector.load %arg5[%c0_16, %c3_17, %c0_18] : memref<1x22x22xf32, #tpu.memory_space<vmem>>, vector<1x16x3xf32>
    tpu.vector_store %arg5[%c0_16, %c3_17, %c0_18], %19 {strides = array<i32>} : memref<1x22x22xf32, #tpu.memory_space<vmem>>, vector<1x16x3xf32>,
    %c0_19 = arith.constant 0 : index
    %c3_20 = arith.constant 3 : index
    %c19_21 = arith.constant 19 : index
    %23 = vector.load %arg5[%c0_19, %c3_20, %c19_21] : memref<1x22x22xf32, #tpu.memory_space<vmem>>, vector<1x16x3xf32>
    tpu.vector_store %arg5[%c0_19, %c3_20, %c19_21], %19 {strides = array<i32>} : memref<1x22x22xf32, #tpu.memory_space<vmem>>, vector<1x16x3xf32>,
    %c0_22 = arith.constant 0 : index
    %c0_23 = arith.constant 0 : index
    %c0_24 = arith.constant 0 : index
    %24 = vector.load %arg6[%c0_22, %c0_23, %c0_24] : memref<1x22x22xf32, #tpu.memory_space<vmem>>, vector<1x3x22xf32>
    tpu.vector_store %arg6[%c0_22, %c0_23, %c0_24], %18 {strides = array<i32>} : memref<1x22x22xf32, #tpu.memory_space<vmem>>, vector<1x3x22xf32>,
    %c0_25 = arith.constant 0 : index
    %c19_26 = arith.constant 19 : index
    %c0_27 = arith.constant 0 : index
    %25 = vector.load %arg6[%c0_25, %c19_26, %c0_27] : memref<1x22x22xf32, #tpu.memory_space<vmem>>, vector<1x3x22xf32>
    tpu.vector_store %arg6[%c0_25, %c19_26, %c0_27], %18 {strides = array<i32>} : memref<1x22x22xf32, #tpu.memory_space<vmem>>, vector<1x3x22xf32>,
    %c0_28 = arith.constant 0 : index
    %c3_29 = arith.constant 3 : index
    %c0_30 = arith.constant 0 : index
    %26 = vector.load %arg6[%c0_28, %c3_29, %c0_30] : memref<1x22x22xf32, #tpu.memory_space<vmem>>, vector<1x16x3xf32>
    tpu.vector_store %arg6[%c0_28, %c3_29, %c0_30], %19 {strides = array<i32>} : memref<1x22x22xf32, #tpu.memory_space<vmem>>, vector<1x16x3xf32>,
    %c0_31 = arith.constant 0 : index
    %c3_32 = arith.constant 3 : index
    %c19_33 = arith.constant 19 : index
    %27 = vector.load %arg6[%c0_31, %c3_32, %c19_33] : memref<1x22x22xf32, #tpu.memory_space<vmem>>, vector<1x16x3xf32>
    tpu.vector_store %arg6[%c0_31, %c3_32, %c19_33], %19 {strides = array<i32>} : memref<1x22x22xf32, #tpu.memory_space<vmem>>, vector<1x16x3xf32>,
    %28 = vector.shape_cast %17 : vector<1x256xf32> to vector<1x16x16xf32>
    %c0_34 = arith.constant 0 : index
    %c3_35 = arith.constant 3 : index
    %c3_36 = arith.constant 3 : index
    %29 = vector.load %arg5[%c0_34, %c3_35, %c3_36] : memref<1x22x22xf32, #tpu.memory_space<vmem>>, vector<1x16x16xf32>
    tpu.vector_store %arg5[%c0_34, %c3_35, %c3_36], %28 {strides = array<i32>} : memref<1x22x22xf32, #tpu.memory_space<vmem>>, vector<1x16x16xf32>,
    %30 = vector.shape_cast %14 : vector<1x256xf32> to vector<1x16x16xf32>
    %c0_37 = arith.constant 0 : index
    %c3_38 = arith.constant 3 : index
    %c3_39 = arith.constant 3 : index
    %31 = vector.load %arg6[%c0_37, %c3_38, %c3_39] : memref<1x22x22xf32, #tpu.memory_space<vmem>>, vector<1x16x16xf32>
    tpu.vector_store %arg6[%c0_37, %c3_38, %c3_39], %30 {strides = array<i32>} : memref<1x22x22xf32, #tpu.memory_space<vmem>>, vector<1x16x16xf32>,
    %c0_40 = arith.constant 0 : index
    %32 = memref.load %arg1[%c0_40] : memref<98xf32, #tpu.memory_space<smem>>
    %c1_41 = arith.constant 1 : index
    %33 = memref.load %arg1[%c1_41] : memref<98xf32, #tpu.memory_space<smem>>
    %c2_42 = arith.constant 2 : index
    %34 = memref.load %arg1[%c2_42] : memref<98xf32, #tpu.memory_space<smem>>
    %c3_43 = arith.constant 3 : index
    %35 = memref.load %arg1[%c3_43] : memref<98xf32, #tpu.memory_space<smem>>
    %c4 = arith.constant 4 : index
    %36 = memref.load %arg1[%c4] : memref<98xf32, #tpu.memory_space<smem>>
    %c5 = arith.constant 5 : index
    %37 = memref.load %arg1[%c5] : memref<98xf32, #tpu.memory_space<smem>>
    %c6 = arith.constant 6 : index
    %38 = memref.load %arg1[%c6] : memref<98xf32, #tpu.memory_space<smem>>
    %c7 = arith.constant 7 : index
    %39 = memref.load %arg1[%c7] : memref<98xf32, #tpu.memory_space<smem>>
    %c8 = arith.constant 8 : index
    %40 = memref.load %arg1[%c8] : memref<98xf32, #tpu.memory_space<smem>>
    %c9 = arith.constant 9 : index
    %41 = memref.load %arg1[%c9] : memref<98xf32, #tpu.memory_space<smem>>
    %c10 = arith.constant 10 : index
    %42 = memref.load %arg1[%c10] : memref<98xf32, #tpu.memory_space<smem>>
    %c11 = arith.constant 11 : index
    %43 = memref.load %arg1[%c11] : memref<98xf32, #tpu.memory_space<smem>>
    %c12 = arith.constant 12 : index
    %44 = memref.load %arg1[%c12] : memref<98xf32, #tpu.memory_space<smem>>
    %c13 = arith.constant 13 : index
    %45 = memref.load %arg1[%c13] : memref<98xf32, #tpu.memory_space<smem>>
    %c14 = arith.constant 14 : index
    %46 = memref.load %arg1[%c14] : memref<98xf32, #tpu.memory_space<smem>>
    %c15 = arith.constant 15 : index
    %47 = memref.load %arg1[%c15] : memref<98xf32, #tpu.memory_space<smem>>
    %c16 = arith.constant 16 : index
    %48 = memref.load %arg1[%c16] : memref<98xf32, #tpu.memory_space<smem>>
    %c17 = arith.constant 17 : index
    %49 = memref.load %arg1[%c17] : memref<98xf32, #tpu.memory_space<smem>>
    %c18 = arith.constant 18 : index
    %50 = memref.load %arg1[%c18] : memref<98xf32, #tpu.memory_space<smem>>
    %c19_44 = arith.constant 19 : index
    %51 = memref.load %arg1[%c19_44] : memref<98xf32, #tpu.memory_space<smem>>
    %c20 = arith.constant 20 : index
    %52 = memref.load %arg1[%c20] : memref<98xf32, #tpu.memory_space<smem>>
    %c21 = arith.constant 21 : index
    %53 = memref.load %arg1[%c21] : memref<98xf32, #tpu.memory_space<smem>>
    %c22 = arith.constant 22 : index
    %54 = memref.load %arg1[%c22] : memref<98xf32, #tpu.memory_space<smem>>
    %c23 = arith.constant 23 : index
    %55 = memref.load %arg1[%c23] : memref<98xf32, #tpu.memory_space<smem>>
    %c24 = arith.constant 24 : index
    %56 = memref.load %arg1[%c24] : memref<98xf32, #tpu.memory_space<smem>>
    %c25 = arith.constant 25 : index
    %57 = memref.load %arg1[%c25] : memref<98xf32, #tpu.memory_space<smem>>
    %c26 = arith.constant 26 : index
    %58 = memref.load %arg1[%c26] : memref<98xf32, #tpu.memory_space<smem>>
    %c27 = arith.constant 27 : index
    %59 = memref.load %arg1[%c27] : memref<98xf32, #tpu.memory_space<smem>>
    %c28 = arith.constant 28 : index
    %60 = memref.load %arg1[%c28] : memref<98xf32, #tpu.memory_space<smem>>
    %c29 = arith.constant 29 : index
    %61 = memref.load %arg1[%c29] : memref<98xf32, #tpu.memory_space<smem>>
    %c30 = arith.constant 30 : index
    %62 = memref.load %arg1[%c30] : memref<98xf32, #tpu.memory_space<smem>>
    %c31 = arith.constant 31 : index
    %63 = memref.load %arg1[%c31] : memref<98xf32, #tpu.memory_space<smem>>
    %c32 = arith.constant 32 : index
    %64 = memref.load %arg1[%c32] : memref<98xf32, #tpu.memory_space<smem>>
    %c33 = arith.constant 33 : index
    %65 = memref.load %arg1[%c33] : memref<98xf32, #tpu.memory_space<smem>>
    %c34 = arith.constant 34 : index
    %66 = memref.load %arg1[%c34] : memref<98xf32, #tpu.memory_space<smem>>
    %c35 = arith.constant 35 : index
    %67 = memref.load %arg1[%c35] : memref<98xf32, #tpu.memory_space<smem>>
    %c36 = arith.constant 36 : index
    %68 = memref.load %arg1[%c36] : memref<98xf32, #tpu.memory_space<smem>>
    %c37 = arith.constant 37 : index
    %69 = memref.load %arg1[%c37] : memref<98xf32, #tpu.memory_space<smem>>
    %c38 = arith.constant 38 : index
    %70 = memref.load %arg1[%c38] : memref<98xf32, #tpu.memory_space<smem>>
    %c39 = arith.constant 39 : index
    %71 = memref.load %arg1[%c39] : memref<98xf32, #tpu.memory_space<smem>>
    %c40 = arith.constant 40 : index
    %72 = memref.load %arg1[%c40] : memref<98xf32, #tpu.memory_space<smem>>
    %c41 = arith.constant 41 : index
    %73 = memref.load %arg1[%c41] : memref<98xf32, #tpu.memory_space<smem>>
    %c42 = arith.constant 42 : index
    %74 = memref.load %arg1[%c42] : memref<98xf32, #tpu.memory_space<smem>>
    %c43 = arith.constant 43 : index
    %75 = memref.load %arg1[%c43] : memref<98xf32, #tpu.memory_space<smem>>
    %c44 = arith.constant 44 : index
    %76 = memref.load %arg1[%c44] : memref<98xf32, #tpu.memory_space<smem>>
    %c45 = arith.constant 45 : index
    %77 = memref.load %arg1[%c45] : memref<98xf32, #tpu.memory_space<smem>>
    %c46 = arith.constant 46 : index
    %78 = memref.load %arg1[%c46] : memref<98xf32, #tpu.memory_space<smem>>
    %c47 = arith.constant 47 : index
    %79 = memref.load %arg1[%c47] : memref<98xf32, #tpu.memory_space<smem>>
    %c48 = arith.constant 48 : index
    %80 = memref.load %arg1[%c48] : memref<98xf32, #tpu.memory_space<smem>>
    %c49 = arith.constant 49 : index
    %81 = memref.load %arg1[%c49] : memref<98xf32, #tpu.memory_space<smem>>
    %c50 = arith.constant 50 : index
    %82 = memref.load %arg1[%c50] : memref<98xf32, #tpu.memory_space<smem>>
    %c51 = arith.constant 51 : index
    %83 = memref.load %arg1[%c51] : memref<98xf32, #tpu.memory_space<smem>>
    %c52 = arith.constant 52 : index
    %84 = memref.load %arg1[%c52] : memref<98xf32, #tpu.memory_space<smem>>
    %c53 = arith.constant 53 : index
    %85 = memref.load %arg1[%c53] : memref<98xf32, #tpu.memory_space<smem>>
    %c54 = arith.constant 54 : index
    %86 = memref.load %arg1[%c54] : memref<98xf32, #tpu.memory_space<smem>>
    %c55 = arith.constant 55 : index
    %87 = memref.load %arg1[%c55] : memref<98xf32, #tpu.memory_space<smem>>
    %c56 = arith.constant 56 : index
    %88 = memref.load %arg1[%c56] : memref<98xf32, #tpu.memory_space<smem>>
    %c57 = arith.constant 57 : index
    %89 = memref.load %arg1[%c57] : memref<98xf32, #tpu.memory_space<smem>>
    %c58 = arith.constant 58 : index
    %90 = memref.load %arg1[%c58] : memref<98xf32, #tpu.memory_space<smem>>
    %c59 = arith.constant 59 : index
    %91 = memref.load %arg1[%c59] : memref<98xf32, #tpu.memory_space<smem>>
    %c60 = arith.constant 60 : index
    %92 = memref.load %arg1[%c60] : memref<98xf32, #tpu.memory_space<smem>>
    %c61 = arith.constant 61 : index
    %93 = memref.load %arg1[%c61] : memref<98xf32, #tpu.memory_space<smem>>
    %c62 = arith.constant 62 : index
    %94 = memref.load %arg1[%c62] : memref<98xf32, #tpu.memory_space<smem>>
    %c63 = arith.constant 63 : index
    %95 = memref.load %arg1[%c63] : memref<98xf32, #tpu.memory_space<smem>>
    %c64 = arith.constant 64 : index
    %96 = memref.load %arg1[%c64] : memref<98xf32, #tpu.memory_space<smem>>
    %c65 = arith.constant 65 : index
    %97 = memref.load %arg1[%c65] : memref<98xf32, #tpu.memory_space<smem>>
    %c66 = arith.constant 66 : index
    %98 = memref.load %arg1[%c66] : memref<98xf32, #tpu.memory_space<smem>>
    %c67 = arith.constant 67 : index
    %99 = memref.load %arg1[%c67] : memref<98xf32, #tpu.memory_space<smem>>
    %c68 = arith.constant 68 : index
    %100 = memref.load %arg1[%c68] : memref<98xf32, #tpu.memory_space<smem>>
    %c69 = arith.constant 69 : index
    %101 = memref.load %arg1[%c69] : memref<98xf32, #tpu.memory_space<smem>>
    %c70 = arith.constant 70 : index
    %102 = memref.load %arg1[%c70] : memref<98xf32, #tpu.memory_space<smem>>
    %c71 = arith.constant 71 : index
    %103 = memref.load %arg1[%c71] : memref<98xf32, #tpu.memory_space<smem>>
    %c72 = arith.constant 72 : index
    %104 = memref.load %arg1[%c72] : memref<98xf32, #tpu.memory_space<smem>>
    %c73 = arith.constant 73 : index
    %105 = memref.load %arg1[%c73] : memref<98xf32, #tpu.memory_space<smem>>
    %c74 = arith.constant 74 : index
    %106 = memref.load %arg1[%c74] : memref<98xf32, #tpu.memory_space<smem>>
    %c75 = arith.constant 75 : index
    %107 = memref.load %arg1[%c75] : memref<98xf32, #tpu.memory_space<smem>>
    %c76 = arith.constant 76 : index
    %108 = memref.load %arg1[%c76] : memref<98xf32, #tpu.memory_space<smem>>
    %c77 = arith.constant 77 : index
    %109 = memref.load %arg1[%c77] : memref<98xf32, #tpu.memory_space<smem>>
    %c78 = arith.constant 78 : index
    %110 = memref.load %arg1[%c78] : memref<98xf32, #tpu.memory_space<smem>>
    %c79 = arith.constant 79 : index
    %111 = memref.load %arg1[%c79] : memref<98xf32, #tpu.memory_space<smem>>
    %c80 = arith.constant 80 : index
    %112 = memref.load %arg1[%c80] : memref<98xf32, #tpu.memory_space<smem>>
    %c81 = arith.constant 81 : index
    %113 = memref.load %arg1[%c81] : memref<98xf32, #tpu.memory_space<smem>>
    %c82 = arith.constant 82 : index
    %114 = memref.load %arg1[%c82] : memref<98xf32, #tpu.memory_space<smem>>
    %c83 = arith.constant 83 : index
    %115 = memref.load %arg1[%c83] : memref<98xf32, #tpu.memory_space<smem>>
    %c84 = arith.constant 84 : index
    %116 = memref.load %arg1[%c84] : memref<98xf32, #tpu.memory_space<smem>>
    %c85 = arith.constant 85 : index
    %117 = memref.load %arg1[%c85] : memref<98xf32, #tpu.memory_space<smem>>
    %c86 = arith.constant 86 : index
    %118 = memref.load %arg1[%c86] : memref<98xf32, #tpu.memory_space<smem>>
    %c87 = arith.constant 87 : index
    %119 = memref.load %arg1[%c87] : memref<98xf32, #tpu.memory_space<smem>>
    %c88 = arith.constant 88 : index
    %120 = memref.load %arg1[%c88] : memref<98xf32, #tpu.memory_space<smem>>
    %c89 = arith.constant 89 : index
    %121 = memref.load %arg1[%c89] : memref<98xf32, #tpu.memory_space<smem>>
    %c90 = arith.constant 90 : index
    %122 = memref.load %arg1[%c90] : memref<98xf32, #tpu.memory_space<smem>>
    %c91 = arith.constant 91 : index
    %123 = memref.load %arg1[%c91] : memref<98xf32, #tpu.memory_space<smem>>
    %c92 = arith.constant 92 : index
    %124 = memref.load %arg1[%c92] : memref<98xf32, #tpu.memory_space<smem>>
    %c93 = arith.constant 93 : index
    %125 = memref.load %arg1[%c93] : memref<98xf32, #tpu.memory_space<smem>>
    %c94 = arith.constant 94 : index
    %126 = memref.load %arg1[%c94] : memref<98xf32, #tpu.memory_space<smem>>
    %c95 = arith.constant 95 : index
    %127 = memref.load %arg1[%c95] : memref<98xf32, #tpu.memory_space<smem>>
    %c96 = arith.constant 96 : index
    %128 = memref.load %arg1[%c96] : memref<98xf32, #tpu.memory_space<smem>>
    %c97 = arith.constant 97 : index
    %129 = memref.load %arg1[%c97] : memref<98xf32, #tpu.memory_space<smem>>
    %cst_45 = arith.constant 0.000000e+00 : f32
    %130 = vector.broadcast %cst_45 : f32 to vector<1x16x16xf32>
    %cst_46 = arith.constant 0.000000e+00 : f32
    %131 = vector.broadcast %cst_46 : f32 to vector<1x16x16xf32>
    %cst_47 = arith.constant 0.000000e+00 : f32
    %132 = vector.broadcast %cst_47 : f32 to vector<1x16x16xf32>
    %cst_48 = arith.constant 0.000000e+00 : f32
    %133 = vector.broadcast %cst_48 : f32 to vector<1x16x16xf32>
    %c0_49 = arith.constant 0 : index
    %c0_50 = arith.constant 0 : index
    %c0_51 = arith.constant 0 : index
    %134 = vector.load %arg5[%c0_49, %c0_50, %c0_51] : memref<1x22x22xf32, #tpu.memory_space<vmem>>, vector<1x16x16xf32>
    %c0_52 = arith.constant 0 : index
    %c0_53 = arith.constant 0 : index
    %c0_54 = arith.constant 0 : index
    %135 = vector.load %arg6[%c0_52, %c0_53, %c0_54] : memref<1x22x22xf32, #tpu.memory_space<vmem>>, vector<1x16x16xf32>
    %136 = vector.broadcast %32 : f32 to vector<1x16x16xf32>
    %137 = arith.mulf %136, %134 : vector<1x16x16xf32>
    %138 = arith.addf %130, %137 : vector<1x16x16xf32>
    %139 = vector.broadcast %81 : f32 to vector<1x16x16xf32>
    %140 = arith.mulf %139, %135 : vector<1x16x16xf32>
    %141 = arith.addf %131, %140 : vector<1x16x16xf32>
    %c0_55 = arith.constant 0 : index
    %c0_56 = arith.constant 0 : index
    %c1_57 = arith.constant 1 : index
    %142 = vector.load %arg5[%c0_55, %c0_56, %c1_57] : memref<1x22x22xf32, #tpu.memory_space<vmem>>, vector<1x16x16xf32>
    %c0_58 = arith.constant 0 : index
    %c0_59 = arith.constant 0 : index
    %c1_60 = arith.constant 1 : index
    %143 = vector.load %arg6[%c0_58, %c0_59, %c1_60] : memref<1x22x22xf32, #tpu.memory_space<vmem>>, vector<1x16x16xf32>
    %144 = vector.broadcast %33 : f32 to vector<1x16x16xf32>
    %145 = arith.mulf %144, %142 : vector<1x16x16xf32>
    %146 = arith.addf %138, %145 : vector<1x16x16xf32>
    %147 = vector.broadcast %82 : f32 to vector<1x16x16xf32>
    %148 = arith.mulf %147, %143 : vector<1x16x16xf32>
    %149 = arith.addf %141, %148 : vector<1x16x16xf32>
    %c0_61 = arith.constant 0 : index
    %c0_62 = arith.constant 0 : index
    %c2_63 = arith.constant 2 : index
    %150 = vector.load %arg5[%c0_61, %c0_62, %c2_63] : memref<1x22x22xf32, #tpu.memory_space<vmem>>, vector<1x16x16xf32>
    %c0_64 = arith.constant 0 : index
    %c0_65 = arith.constant 0 : index
    %c2_66 = arith.constant 2 : index
    %151 = vector.load %arg6[%c0_64, %c0_65, %c2_66] : memref<1x22x22xf32, #tpu.memory_space<vmem>>, vector<1x16x16xf32>
    %152 = vector.broadcast %34 : f32 to vector<1x16x16xf32>
    %153 = arith.mulf %152, %150 : vector<1x16x16xf32>
    %154 = arith.addf %146, %153 : vector<1x16x16xf32>
    %155 = vector.broadcast %83 : f32 to vector<1x16x16xf32>
    %156 = arith.mulf %155, %151 : vector<1x16x16xf32>
    %157 = arith.addf %149, %156 : vector<1x16x16xf32>
    %c0_67 = arith.constant 0 : index
    %c0_68 = arith.constant 0 : index
    %c3_69 = arith.constant 3 : index
    %158 = vector.load %arg5[%c0_67, %c0_68, %c3_69] : memref<1x22x22xf32, #tpu.memory_space<vmem>>, vector<1x16x16xf32>
    %c0_70 = arith.constant 0 : index
    %c0_71 = arith.constant 0 : index
    %c3_72 = arith.constant 3 : index
    %159 = vector.load %arg6[%c0_70, %c0_71, %c3_72] : memref<1x22x22xf32, #tpu.memory_space<vmem>>, vector<1x16x16xf32>
    %160 = vector.broadcast %35 : f32 to vector<1x16x16xf32>
    %161 = arith.mulf %160, %158 : vector<1x16x16xf32>
    %162 = arith.addf %154, %161 : vector<1x16x16xf32>
    %163 = vector.broadcast %84 : f32 to vector<1x16x16xf32>
    %164 = arith.mulf %163, %159 : vector<1x16x16xf32>
    %165 = arith.addf %157, %164 : vector<1x16x16xf32>
    %c0_73 = arith.constant 0 : index
    %c0_74 = arith.constant 0 : index
    %c4_75 = arith.constant 4 : index
    %166 = vector.load %arg5[%c0_73, %c0_74, %c4_75] : memref<1x22x22xf32, #tpu.memory_space<vmem>>, vector<1x16x16xf32>
    %c0_76 = arith.constant 0 : index
    %c0_77 = arith.constant 0 : index
    %c4_78 = arith.constant 4 : index
    %167 = vector.load %arg6[%c0_76, %c0_77, %c4_78] : memref<1x22x22xf32, #tpu.memory_space<vmem>>, vector<1x16x16xf32>
    %168 = vector.broadcast %36 : f32 to vector<1x16x16xf32>
    %169 = arith.mulf %168, %166 : vector<1x16x16xf32>
    %170 = arith.addf %162, %169 : vector<1x16x16xf32>
    %171 = vector.broadcast %85 : f32 to vector<1x16x16xf32>
    %172 = arith.mulf %171, %167 : vector<1x16x16xf32>
    %173 = arith.addf %165, %172 : vector<1x16x16xf32>
    %c0_79 = arith.constant 0 : index
    %c0_80 = arith.constant 0 : index
    %c5_81 = arith.constant 5 : index
    %174 = vector.load %arg5[%c0_79, %c0_80, %c5_81] : memref<1x22x22xf32, #tpu.memory_space<vmem>>, vector<1x16x16xf32>
    %c0_82 = arith.constant 0 : index
    %c0_83 = arith.constant 0 : index
    %c5_84 = arith.constant 5 : index
    %175 = vector.load %arg6[%c0_82, %c0_83, %c5_84] : memref<1x22x22xf32, #tpu.memory_space<vmem>>, vector<1x16x16xf32>
    %176 = vector.broadcast %37 : f32 to vector<1x16x16xf32>
    %177 = arith.mulf %176, %174 : vector<1x16x16xf32>
    %178 = arith.addf %170, %177 : vector<1x16x16xf32>
    %179 = vector.broadcast %86 : f32 to vector<1x16x16xf32>
    %180 = arith.mulf %179, %175 : vector<1x16x16xf32>
    %181 = arith.addf %173, %180 : vector<1x16x16xf32>
    %c0_85 = arith.constant 0 : index
    %c0_86 = arith.constant 0 : index
    %c6_87 = arith.constant 6 : index
    %182 = vector.load %arg5[%c0_85, %c0_86, %c6_87] : memref<1x22x22xf32, #tpu.memory_space<vmem>>, vector<1x16x16xf32>
    %c0_88 = arith.constant 0 : index
    %c0_89 = arith.constant 0 : index
    %c6_90 = arith.constant 6 : index
    %183 = vector.load %arg6[%c0_88, %c0_89, %c6_90] : memref<1x22x22xf32, #tpu.memory_space<vmem>>, vector<1x16x16xf32>
    %184 = vector.broadcast %38 : f32 to vector<1x16x16xf32>
    %185 = arith.mulf %184, %182 : vector<1x16x16xf32>
    %186 = arith.addf %178, %185 : vector<1x16x16xf32>
    %187 = vector.broadcast %87 : f32 to vector<1x16x16xf32>
    %188 = arith.mulf %187, %183 : vector<1x16x16xf32>
    %189 = arith.addf %181, %188 : vector<1x16x16xf32>
    %c0_91 = arith.constant 0 : index
    %c1_92 = arith.constant 1 : index
    %c0_93 = arith.constant 0 : index
    %190 = vector.load %arg5[%c0_91, %c1_92, %c0_93] : memref<1x22x22xf32, #tpu.memory_space<vmem>>, vector<1x16x16xf32>
    %c0_94 = arith.constant 0 : index
    %c1_95 = arith.constant 1 : index
    %c0_96 = arith.constant 0 : index
    %191 = vector.load %arg6[%c0_94, %c1_95, %c0_96] : memref<1x22x22xf32, #tpu.memory_space<vmem>>, vector<1x16x16xf32>
    %192 = vector.broadcast %39 : f32 to vector<1x16x16xf32>
    %193 = arith.mulf %192, %190 : vector<1x16x16xf32>
    %194 = arith.addf %132, %193 : vector<1x16x16xf32>
    %195 = vector.broadcast %88 : f32 to vector<1x16x16xf32>
    %196 = arith.mulf %195, %191 : vector<1x16x16xf32>
    %197 = arith.addf %133, %196 : vector<1x16x16xf32>
    %c0_97 = arith.constant 0 : index
    %c1_98 = arith.constant 1 : index
    %c1_99 = arith.constant 1 : index
    %198 = vector.load %arg5[%c0_97, %c1_98, %c1_99] : memref<1x22x22xf32, #tpu.memory_space<vmem>>, vector<1x16x16xf32>
    %c0_100 = arith.constant 0 : index
    %c1_101 = arith.constant 1 : index
    %c1_102 = arith.constant 1 : index
    %199 = vector.load %arg6[%c0_100, %c1_101, %c1_102] : memref<1x22x22xf32, #tpu.memory_space<vmem>>, vector<1x16x16xf32>
    %200 = vector.broadcast %40 : f32 to vector<1x16x16xf32>
    %201 = arith.mulf %200, %198 : vector<1x16x16xf32>
    %202 = arith.addf %194, %201 : vector<1x16x16xf32>
    %203 = vector.broadcast %89 : f32 to vector<1x16x16xf32>
    %204 = arith.mulf %203, %199 : vector<1x16x16xf32>
    %205 = arith.addf %197, %204 : vector<1x16x16xf32>
    %c0_103 = arith.constant 0 : index
    %c1_104 = arith.constant 1 : index
    %c2_105 = arith.constant 2 : index
    %206 = vector.load %arg5[%c0_103, %c1_104, %c2_105] : memref<1x22x22xf32, #tpu.memory_space<vmem>>, vector<1x16x16xf32>
    %c0_106 = arith.constant 0 : index
    %c1_107 = arith.constant 1 : index
    %c2_108 = arith.constant 2 : index
    %207 = vector.load %arg6[%c0_106, %c1_107, %c2_108] : memref<1x22x22xf32, #tpu.memory_space<vmem>>, vector<1x16x16xf32>
    %208 = vector.broadcast %41 : f32 to vector<1x16x16xf32>
    %209 = arith.mulf %208, %206 : vector<1x16x16xf32>
    %210 = arith.addf %202, %209 : vector<1x16x16xf32>
    %211 = vector.broadcast %90 : f32 to vector<1x16x16xf32>
    %212 = arith.mulf %211, %207 : vector<1x16x16xf32>
    %213 = arith.addf %205, %212 : vector<1x16x16xf32>
    %c0_109 = arith.constant 0 : index
    %c1_110 = arith.constant 1 : index
    %c3_111 = arith.constant 3 : index
    %214 = vector.load %arg5[%c0_109, %c1_110, %c3_111] : memref<1x22x22xf32, #tpu.memory_space<vmem>>, vector<1x16x16xf32>
    %c0_112 = arith.constant 0 : index
    %c1_113 = arith.constant 1 : index
    %c3_114 = arith.constant 3 : index
    %215 = vector.load %arg6[%c0_112, %c1_113, %c3_114] : memref<1x22x22xf32, #tpu.memory_space<vmem>>, vector<1x16x16xf32>
    %216 = vector.broadcast %42 : f32 to vector<1x16x16xf32>
    %217 = arith.mulf %216, %214 : vector<1x16x16xf32>
    %218 = arith.addf %210, %217 : vector<1x16x16xf32>
    %219 = vector.broadcast %91 : f32 to vector<1x16x16xf32>
    %220 = arith.mulf %219, %215 : vector<1x16x16xf32>
    %221 = arith.addf %213, %220 : vector<1x16x16xf32>
    %c0_115 = arith.constant 0 : index
    %c1_116 = arith.constant 1 : index
    %c4_117 = arith.constant 4 : index
    %222 = vector.load %arg5[%c0_115, %c1_116, %c4_117] : memref<1x22x22xf32, #tpu.memory_space<vmem>>, vector<1x16x16xf32>
    %c0_118 = arith.constant 0 : index
    %c1_119 = arith.constant 1 : index
    %c4_120 = arith.constant 4 : index
    %223 = vector.load %arg6[%c0_118, %c1_119, %c4_120] : memref<1x22x22xf32, #tpu.memory_space<vmem>>, vector<1x16x16xf32>
    %224 = vector.broadcast %43 : f32 to vector<1x16x16xf32>
    %225 = arith.mulf %224, %222 : vector<1x16x16xf32>
    %226 = arith.addf %218, %225 : vector<1x16x16xf32>
    %227 = vector.broadcast %92 : f32 to vector<1x16x16xf32>
    %228 = arith.mulf %227, %223 : vector<1x16x16xf32>
    %229 = arith.addf %221, %228 : vector<1x16x16xf32>
    %c0_121 = arith.constant 0 : index
    %c1_122 = arith.constant 1 : index
    %c5_123 = arith.constant 5 : index
    %230 = vector.load %arg5[%c0_121, %c1_122, %c5_123] : memref<1x22x22xf32, #tpu.memory_space<vmem>>, vector<1x16x16xf32>
    %c0_124 = arith.constant 0 : index
    %c1_125 = arith.constant 1 : index
    %c5_126 = arith.constant 5 : index
    %231 = vector.load %arg6[%c0_124, %c1_125, %c5_126] : memref<1x22x22xf32, #tpu.memory_space<vmem>>, vector<1x16x16xf32>
    %232 = vector.broadcast %44 : f32 to vector<1x16x16xf32>
    %233 = arith.mulf %232, %230 : vector<1x16x16xf32>
    %234 = arith.addf %226, %233 : vector<1x16x16xf32>
    %235 = vector.broadcast %93 : f32 to vector<1x16x16xf32>
    %236 = arith.mulf %235, %231 : vector<1x16x16xf32>
    %237 = arith.addf %229, %236 : vector<1x16x16xf32>
    %c0_127 = arith.constant 0 : index
    %c1_128 = arith.constant 1 : index
    %c6_129 = arith.constant 6 : index
    %238 = vector.load %arg5[%c0_127, %c1_128, %c6_129] : memref<1x22x22xf32, #tpu.memory_space<vmem>>, vector<1x16x16xf32>
    %c0_130 = arith.constant 0 : index
    %c1_131 = arith.constant 1 : index
    %c6_132 = arith.constant 6 : index
    %239 = vector.load %arg6[%c0_130, %c1_131, %c6_132] : memref<1x22x22xf32, #tpu.memory_space<vmem>>, vector<1x16x16xf32>
    %240 = vector.broadcast %45 : f32 to vector<1x16x16xf32>
    %241 = arith.mulf %240, %238 : vector<1x16x16xf32>
    %242 = arith.addf %234, %241 : vector<1x16x16xf32>
    %243 = vector.broadcast %94 : f32 to vector<1x16x16xf32>
    %244 = arith.mulf %243, %239 : vector<1x16x16xf32>
    %245 = arith.addf %237, %244 : vector<1x16x16xf32>
    %c0_133 = arith.constant 0 : index
    %c2_134 = arith.constant 2 : index
    %c0_135 = arith.constant 0 : index
    %246 = vector.load %arg5[%c0_133, %c2_134, %c0_135] : memref<1x22x22xf32, #tpu.memory_space<vmem>>, vector<1x16x16xf32>
    %c0_136 = arith.constant 0 : index
    %c2_137 = arith.constant 2 : index
    %c0_138 = arith.constant 0 : index
    %247 = vector.load %arg6[%c0_136, %c2_137, %c0_138] : memref<1x22x22xf32, #tpu.memory_space<vmem>>, vector<1x16x16xf32>
    %248 = vector.broadcast %46 : f32 to vector<1x16x16xf32>
    %249 = arith.mulf %248, %246 : vector<1x16x16xf32>
    %250 = arith.addf %186, %249 : vector<1x16x16xf32>
    %251 = vector.broadcast %95 : f32 to vector<1x16x16xf32>
    %252 = arith.mulf %251, %247 : vector<1x16x16xf32>
    %253 = arith.addf %189, %252 : vector<1x16x16xf32>
    %c0_139 = arith.constant 0 : index
    %c2_140 = arith.constant 2 : index
    %c1_141 = arith.constant 1 : index
    %254 = vector.load %arg5[%c0_139, %c2_140, %c1_141] : memref<1x22x22xf32, #tpu.memory_space<vmem>>, vector<1x16x16xf32>
    %c0_142 = arith.constant 0 : index
    %c2_143 = arith.constant 2 : index
    %c1_144 = arith.constant 1 : index
    %255 = vector.load %arg6[%c0_142, %c2_143, %c1_144] : memref<1x22x22xf32, #tpu.memory_space<vmem>>, vector<1x16x16xf32>
    %256 = vector.broadcast %47 : f32 to vector<1x16x16xf32>
    %257 = arith.mulf %256, %254 : vector<1x16x16xf32>
    %258 = arith.addf %250, %257 : vector<1x16x16xf32>
    %259 = vector.broadcast %96 : f32 to vector<1x16x16xf32>
    %260 = arith.mulf %259, %255 : vector<1x16x16xf32>
    %261 = arith.addf %253, %260 : vector<1x16x16xf32>
    %c0_145 = arith.constant 0 : index
    %c2_146 = arith.constant 2 : index
    %c2_147 = arith.constant 2 : index
    %262 = vector.load %arg5[%c0_145, %c2_146, %c2_147] : memref<1x22x22xf32, #tpu.memory_space<vmem>>, vector<1x16x16xf32>
    %c0_148 = arith.constant 0 : index
    %c2_149 = arith.constant 2 : index
    %c2_150 = arith.constant 2 : index
    %263 = vector.load %arg6[%c0_148, %c2_149, %c2_150] : memref<1x22x22xf32, #tpu.memory_space<vmem>>, vector<1x16x16xf32>
    %264 = vector.broadcast %48 : f32 to vector<1x16x16xf32>
    %265 = arith.mulf %264, %262 : vector<1x16x16xf32>
    %266 = arith.addf %258, %265 : vector<1x16x16xf32>
    %267 = vector.broadcast %97 : f32 to vector<1x16x16xf32>
    %268 = arith.mulf %267, %263 : vector<1x16x16xf32>
    %269 = arith.addf %261, %268 : vector<1x16x16xf32>
    %c0_151 = arith.constant 0 : index
    %c2_152 = arith.constant 2 : index
    %c3_153 = arith.constant 3 : index
    %270 = vector.load %arg5[%c0_151, %c2_152, %c3_153] : memref<1x22x22xf32, #tpu.memory_space<vmem>>, vector<1x16x16xf32>
    %c0_154 = arith.constant 0 : index
    %c2_155 = arith.constant 2 : index
    %c3_156 = arith.constant 3 : index
    %271 = vector.load %arg6[%c0_154, %c2_155, %c3_156] : memref<1x22x22xf32, #tpu.memory_space<vmem>>, vector<1x16x16xf32>
    %272 = vector.broadcast %49 : f32 to vector<1x16x16xf32>
    %273 = arith.mulf %272, %270 : vector<1x16x16xf32>
    %274 = arith.addf %266, %273 : vector<1x16x16xf32>
    %275 = vector.broadcast %98 : f32 to vector<1x16x16xf32>
    %276 = arith.mulf %275, %271 : vector<1x16x16xf32>
    %277 = arith.addf %269, %276 : vector<1x16x16xf32>
    %c0_157 = arith.constant 0 : index
    %c2_158 = arith.constant 2 : index
    %c4_159 = arith.constant 4 : index
    %278 = vector.load %arg5[%c0_157, %c2_158, %c4_159] : memref<1x22x22xf32, #tpu.memory_space<vmem>>, vector<1x16x16xf32>
    %c0_160 = arith.constant 0 : index
    %c2_161 = arith.constant 2 : index
    %c4_162 = arith.constant 4 : index
    %279 = vector.load %arg6[%c0_160, %c2_161, %c4_162] : memref<1x22x22xf32, #tpu.memory_space<vmem>>, vector<1x16x16xf32>
    %280 = vector.broadcast %50 : f32 to vector<1x16x16xf32>
    %281 = arith.mulf %280, %278 : vector<1x16x16xf32>
    %282 = arith.addf %274, %281 : vector<1x16x16xf32>
    %283 = vector.broadcast %99 : f32 to vector<1x16x16xf32>
    %284 = arith.mulf %283, %279 : vector<1x16x16xf32>
    %285 = arith.addf %277, %284 : vector<1x16x16xf32>
    %c0_163 = arith.constant 0 : index
    %c2_164 = arith.constant 2 : index
    %c5_165 = arith.constant 5 : index
    %286 = vector.load %arg5[%c0_163, %c2_164, %c5_165] : memref<1x22x22xf32, #tpu.memory_space<vmem>>, vector<1x16x16xf32>
    %c0_166 = arith.constant 0 : index
    %c2_167 = arith.constant 2 : index
    %c5_168 = arith.constant 5 : index
    %287 = vector.load %arg6[%c0_166, %c2_167, %c5_168] : memref<1x22x22xf32, #tpu.memory_space<vmem>>, vector<1x16x16xf32>
    %288 = vector.broadcast %51 : f32 to vector<1x16x16xf32>
    %289 = arith.mulf %288, %286 : vector<1x16x16xf32>
    %290 = arith.addf %282, %289 : vector<1x16x16xf32>
    %291 = vector.broadcast %100 : f32 to vector<1x16x16xf32>
    %292 = arith.mulf %291, %287 : vector<1x16x16xf32>
    %293 = arith.addf %285, %292 : vector<1x16x16xf32>
    %c0_169 = arith.constant 0 : index
    %c2_170 = arith.constant 2 : index
    %c6_171 = arith.constant 6 : index
    %294 = vector.load %arg5[%c0_169, %c2_170, %c6_171] : memref<1x22x22xf32, #tpu.memory_space<vmem>>, vector<1x16x16xf32>
    %c0_172 = arith.constant 0 : index
    %c2_173 = arith.constant 2 : index
    %c6_174 = arith.constant 6 : index
    %295 = vector.load %arg6[%c0_172, %c2_173, %c6_174] : memref<1x22x22xf32, #tpu.memory_space<vmem>>, vector<1x16x16xf32>
    %296 = vector.broadcast %52 : f32 to vector<1x16x16xf32>
    %297 = arith.mulf %296, %294 : vector<1x16x16xf32>
    %298 = arith.addf %290, %297 : vector<1x16x16xf32>
    %299 = vector.broadcast %101 : f32 to vector<1x16x16xf32>
    %300 = arith.mulf %299, %295 : vector<1x16x16xf32>
    %301 = arith.addf %293, %300 : vector<1x16x16xf32>
    %c0_175 = arith.constant 0 : index
    %c3_176 = arith.constant 3 : index
    %c0_177 = arith.constant 0 : index
    %302 = vector.load %arg5[%c0_175, %c3_176, %c0_177] : memref<1x22x22xf32, #tpu.memory_space<vmem>>, vector<1x16x16xf32>
    %c0_178 = arith.constant 0 : index
    %c3_179 = arith.constant 3 : index
    %c0_180 = arith.constant 0 : index
    %303 = vector.load %arg6[%c0_178, %c3_179, %c0_180] : memref<1x22x22xf32, #tpu.memory_space<vmem>>, vector<1x16x16xf32>
    %304 = vector.broadcast %53 : f32 to vector<1x16x16xf32>
    %305 = arith.mulf %304, %302 : vector<1x16x16xf32>
    %306 = arith.addf %242, %305 : vector<1x16x16xf32>
    %307 = vector.broadcast %102 : f32 to vector<1x16x16xf32>
    %308 = arith.mulf %307, %303 : vector<1x16x16xf32>
    %309 = arith.addf %245, %308 : vector<1x16x16xf32>
    %c0_181 = arith.constant 0 : index
    %c3_182 = arith.constant 3 : index
    %c1_183 = arith.constant 1 : index
    %310 = vector.load %arg5[%c0_181, %c3_182, %c1_183] : memref<1x22x22xf32, #tpu.memory_space<vmem>>, vector<1x16x16xf32>
    %c0_184 = arith.constant 0 : index
    %c3_185 = arith.constant 3 : index
    %c1_186 = arith.constant 1 : index
    %311 = vector.load %arg6[%c0_184, %c3_185, %c1_186] : memref<1x22x22xf32, #tpu.memory_space<vmem>>, vector<1x16x16xf32>
    %312 = vector.broadcast %54 : f32 to vector<1x16x16xf32>
    %313 = arith.mulf %312, %310 : vector<1x16x16xf32>
    %314 = arith.addf %306, %313 : vector<1x16x16xf32>
    %315 = vector.broadcast %103 : f32 to vector<1x16x16xf32>
    %316 = arith.mulf %315, %311 : vector<1x16x16xf32>
    %317 = arith.addf %309, %316 : vector<1x16x16xf32>
    %c0_187 = arith.constant 0 : index
    %c3_188 = arith.constant 3 : index
    %c2_189 = arith.constant 2 : index
    %318 = vector.load %arg5[%c0_187, %c3_188, %c2_189] : memref<1x22x22xf32, #tpu.memory_space<vmem>>, vector<1x16x16xf32>
    %c0_190 = arith.constant 0 : index
    %c3_191 = arith.constant 3 : index
    %c2_192 = arith.constant 2 : index
    %319 = vector.load %arg6[%c0_190, %c3_191, %c2_192] : memref<1x22x22xf32, #tpu.memory_space<vmem>>, vector<1x16x16xf32>
    %320 = vector.broadcast %55 : f32 to vector<1x16x16xf32>
    %321 = arith.mulf %320, %318 : vector<1x16x16xf32>
    %322 = arith.addf %314, %321 : vector<1x16x16xf32>
    %323 = vector.broadcast %104 : f32 to vector<1x16x16xf32>
    %324 = arith.mulf %323, %319 : vector<1x16x16xf32>
    %325 = arith.addf %317, %324 : vector<1x16x16xf32>
    %c0_193 = arith.constant 0 : index
    %c3_194 = arith.constant 3 : index
    %c3_195 = arith.constant 3 : index
    %326 = vector.load %arg5[%c0_193, %c3_194, %c3_195] : memref<1x22x22xf32, #tpu.memory_space<vmem>>, vector<1x16x16xf32>
    %c0_196 = arith.constant 0 : index
    %c3_197 = arith.constant 3 : index
    %c3_198 = arith.constant 3 : index
    %327 = vector.load %arg6[%c0_196, %c3_197, %c3_198] : memref<1x22x22xf32, #tpu.memory_space<vmem>>, vector<1x16x16xf32>
    %328 = vector.broadcast %56 : f32 to vector<1x16x16xf32>
    %329 = arith.mulf %328, %326 : vector<1x16x16xf32>
    %330 = arith.addf %322, %329 : vector<1x16x16xf32>
    %331 = vector.broadcast %105 : f32 to vector<1x16x16xf32>
    %332 = arith.mulf %331, %327 : vector<1x16x16xf32>
    %333 = arith.addf %325, %332 : vector<1x16x16xf32>
    %c0_199 = arith.constant 0 : index
    %c3_200 = arith.constant 3 : index
    %c4_201 = arith.constant 4 : index
    %334 = vector.load %arg5[%c0_199, %c3_200, %c4_201] : memref<1x22x22xf32, #tpu.memory_space<vmem>>, vector<1x16x16xf32>
    %c0_202 = arith.constant 0 : index
    %c3_203 = arith.constant 3 : index
    %c4_204 = arith.constant 4 : index
    %335 = vector.load %arg6[%c0_202, %c3_203, %c4_204] : memref<1x22x22xf32, #tpu.memory_space<vmem>>, vector<1x16x16xf32>
    %336 = vector.broadcast %57 : f32 to vector<1x16x16xf32>
    %337 = arith.mulf %336, %334 : vector<1x16x16xf32>
    %338 = arith.addf %330, %337 : vector<1x16x16xf32>
    %339 = vector.broadcast %106 : f32 to vector<1x16x16xf32>
    %340 = arith.mulf %339, %335 : vector<1x16x16xf32>
    %341 = arith.addf %333, %340 : vector<1x16x16xf32>
    %c0_205 = arith.constant 0 : index
    %c3_206 = arith.constant 3 : index
    %c5_207 = arith.constant 5 : index
    %342 = vector.load %arg5[%c0_205, %c3_206, %c5_207] : memref<1x22x22xf32, #tpu.memory_space<vmem>>, vector<1x16x16xf32>
    %c0_208 = arith.constant 0 : index
    %c3_209 = arith.constant 3 : index
    %c5_210 = arith.constant 5 : index
    %343 = vector.load %arg6[%c0_208, %c3_209, %c5_210] : memref<1x22x22xf32, #tpu.memory_space<vmem>>, vector<1x16x16xf32>
    %344 = vector.broadcast %58 : f32 to vector<1x16x16xf32>
    %345 = arith.mulf %344, %342 : vector<1x16x16xf32>
    %346 = arith.addf %338, %345 : vector<1x16x16xf32>
    %347 = vector.broadcast %107 : f32 to vector<1x16x16xf32>
    %348 = arith.mulf %347, %343 : vector<1x16x16xf32>
    %349 = arith.addf %341, %348 : vector<1x16x16xf32>
    %c0_211 = arith.constant 0 : index
    %c3_212 = arith.constant 3 : index
    %c6_213 = arith.constant 6 : index
    %350 = vector.load %arg5[%c0_211, %c3_212, %c6_213] : memref<1x22x22xf32, #tpu.memory_space<vmem>>, vector<1x16x16xf32>
    %c0_214 = arith.constant 0 : index
    %c3_215 = arith.constant 3 : index
    %c6_216 = arith.constant 6 : index
    %351 = vector.load %arg6[%c0_214, %c3_215, %c6_216] : memref<1x22x22xf32, #tpu.memory_space<vmem>>, vector<1x16x16xf32>
    %352 = vector.broadcast %59 : f32 to vector<1x16x16xf32>
    %353 = arith.mulf %352, %350 : vector<1x16x16xf32>
    %354 = arith.addf %346, %353 : vector<1x16x16xf32>
    %355 = vector.broadcast %108 : f32 to vector<1x16x16xf32>
    %356 = arith.mulf %355, %351 : vector<1x16x16xf32>
    %357 = arith.addf %349, %356 : vector<1x16x16xf32>
    %c0_217 = arith.constant 0 : index
    %c4_218 = arith.constant 4 : index
    %c0_219 = arith.constant 0 : index
    %358 = vector.load %arg5[%c0_217, %c4_218, %c0_219] : memref<1x22x22xf32, #tpu.memory_space<vmem>>, vector<1x16x16xf32>
    %c0_220 = arith.constant 0 : index
    %c4_221 = arith.constant 4 : index
    %c0_222 = arith.constant 0 : index
    %359 = vector.load %arg6[%c0_220, %c4_221, %c0_222] : memref<1x22x22xf32, #tpu.memory_space<vmem>>, vector<1x16x16xf32>
    %360 = vector.broadcast %60 : f32 to vector<1x16x16xf32>
    %361 = arith.mulf %360, %358 : vector<1x16x16xf32>
    %362 = arith.addf %298, %361 : vector<1x16x16xf32>
    %363 = vector.broadcast %109 : f32 to vector<1x16x16xf32>
    %364 = arith.mulf %363, %359 : vector<1x16x16xf32>
    %365 = arith.addf %301, %364 : vector<1x16x16xf32>
    %c0_223 = arith.constant 0 : index
    %c4_224 = arith.constant 4 : index
    %c1_225 = arith.constant 1 : index
    %366 = vector.load %arg5[%c0_223, %c4_224, %c1_225] : memref<1x22x22xf32, #tpu.memory_space<vmem>>, vector<1x16x16xf32>
    %c0_226 = arith.constant 0 : index
    %c4_227 = arith.constant 4 : index
    %c1_228 = arith.constant 1 : index
    %367 = vector.load %arg6[%c0_226, %c4_227, %c1_228] : memref<1x22x22xf32, #tpu.memory_space<vmem>>, vector<1x16x16xf32>
    %368 = vector.broadcast %61 : f32 to vector<1x16x16xf32>
    %369 = arith.mulf %368, %366 : vector<1x16x16xf32>
    %370 = arith.addf %362, %369 : vector<1x16x16xf32>
    %371 = vector.broadcast %110 : f32 to vector<1x16x16xf32>
    %372 = arith.mulf %371, %367 : vector<1x16x16xf32>
    %373 = arith.addf %365, %372 : vector<1x16x16xf32>
    %c0_229 = arith.constant 0 : index
    %c4_230 = arith.constant 4 : index
    %c2_231 = arith.constant 2 : index
    %374 = vector.load %arg5[%c0_229, %c4_230, %c2_231] : memref<1x22x22xf32, #tpu.memory_space<vmem>>, vector<1x16x16xf32>
    %c0_232 = arith.constant 0 : index
    %c4_233 = arith.constant 4 : index
    %c2_234 = arith.constant 2 : index
    %375 = vector.load %arg6[%c0_232, %c4_233, %c2_234] : memref<1x22x22xf32, #tpu.memory_space<vmem>>, vector<1x16x16xf32>
    %376 = vector.broadcast %62 : f32 to vector<1x16x16xf32>
    %377 = arith.mulf %376, %374 : vector<1x16x16xf32>
    %378 = arith.addf %370, %377 : vector<1x16x16xf32>
    %379 = vector.broadcast %111 : f32 to vector<1x16x16xf32>
    %380 = arith.mulf %379, %375 : vector<1x16x16xf32>
    %381 = arith.addf %373, %380 : vector<1x16x16xf32>
    %c0_235 = arith.constant 0 : index
    %c4_236 = arith.constant 4 : index
    %c3_237 = arith.constant 3 : index
    %382 = vector.load %arg5[%c0_235, %c4_236, %c3_237] : memref<1x22x22xf32, #tpu.memory_space<vmem>>, vector<1x16x16xf32>
    %c0_238 = arith.constant 0 : index
    %c4_239 = arith.constant 4 : index
    %c3_240 = arith.constant 3 : index
    %383 = vector.load %arg6[%c0_238, %c4_239, %c3_240] : memref<1x22x22xf32, #tpu.memory_space<vmem>>, vector<1x16x16xf32>
    %384 = vector.broadcast %63 : f32 to vector<1x16x16xf32>
    %385 = arith.mulf %384, %382 : vector<1x16x16xf32>
    %386 = arith.addf %378, %385 : vector<1x16x16xf32>
    %387 = vector.broadcast %112 : f32 to vector<1x16x16xf32>
    %388 = arith.mulf %387, %383 : vector<1x16x16xf32>
    %389 = arith.addf %381, %388 : vector<1x16x16xf32>
    %c0_241 = arith.constant 0 : index
    %c4_242 = arith.constant 4 : index
    %c4_243 = arith.constant 4 : index
    %390 = vector.load %arg5[%c0_241, %c4_242, %c4_243] : memref<1x22x22xf32, #tpu.memory_space<vmem>>, vector<1x16x16xf32>
    %c0_244 = arith.constant 0 : index
    %c4_245 = arith.constant 4 : index
    %c4_246 = arith.constant 4 : index
    %391 = vector.load %arg6[%c0_244, %c4_245, %c4_246] : memref<1x22x22xf32, #tpu.memory_space<vmem>>, vector<1x16x16xf32>
    %392 = vector.broadcast %64 : f32 to vector<1x16x16xf32>
    %393 = arith.mulf %392, %390 : vector<1x16x16xf32>
    %394 = arith.addf %386, %393 : vector<1x16x16xf32>
    %395 = vector.broadcast %113 : f32 to vector<1x16x16xf32>
    %396 = arith.mulf %395, %391 : vector<1x16x16xf32>
    %397 = arith.addf %389, %396 : vector<1x16x16xf32>
    %c0_247 = arith.constant 0 : index
    %c4_248 = arith.constant 4 : index
    %c5_249 = arith.constant 5 : index
    %398 = vector.load %arg5[%c0_247, %c4_248, %c5_249] : memref<1x22x22xf32, #tpu.memory_space<vmem>>, vector<1x16x16xf32>
    %c0_250 = arith.constant 0 : index
    %c4_251 = arith.constant 4 : index
    %c5_252 = arith.constant 5 : index
    %399 = vector.load %arg6[%c0_250, %c4_251, %c5_252] : memref<1x22x22xf32, #tpu.memory_space<vmem>>, vector<1x16x16xf32>
    %400 = vector.broadcast %65 : f32 to vector<1x16x16xf32>
    %401 = arith.mulf %400, %398 : vector<1x16x16xf32>
    %402 = arith.addf %394, %401 : vector<1x16x16xf32>
    %403 = vector.broadcast %114 : f32 to vector<1x16x16xf32>
    %404 = arith.mulf %403, %399 : vector<1x16x16xf32>
    %405 = arith.addf %397, %404 : vector<1x16x16xf32>
    %c0_253 = arith.constant 0 : index
    %c4_254 = arith.constant 4 : index
    %c6_255 = arith.constant 6 : index
    %406 = vector.load %arg5[%c0_253, %c4_254, %c6_255] : memref<1x22x22xf32, #tpu.memory_space<vmem>>, vector<1x16x16xf32>
    %c0_256 = arith.constant 0 : index
    %c4_257 = arith.constant 4 : index
    %c6_258 = arith.constant 6 : index
    %407 = vector.load %arg6[%c0_256, %c4_257, %c6_258] : memref<1x22x22xf32, #tpu.memory_space<vmem>>, vector<1x16x16xf32>
    %408 = vector.broadcast %66 : f32 to vector<1x16x16xf32>
    %409 = arith.mulf %408, %406 : vector<1x16x16xf32>
    %410 = arith.addf %402, %409 : vector<1x16x16xf32>
    %411 = vector.broadcast %115 : f32 to vector<1x16x16xf32>
    %412 = arith.mulf %411, %407 : vector<1x16x16xf32>
    %413 = arith.addf %405, %412 : vector<1x16x16xf32>
    %c0_259 = arith.constant 0 : index
    %c5_260 = arith.constant 5 : index
    %c0_261 = arith.constant 0 : index
    %414 = vector.load %arg5[%c0_259, %c5_260, %c0_261] : memref<1x22x22xf32, #tpu.memory_space<vmem>>, vector<1x16x16xf32>
    %c0_262 = arith.constant 0 : index
    %c5_263 = arith.constant 5 : index
    %c0_264 = arith.constant 0 : index
    %415 = vector.load %arg6[%c0_262, %c5_263, %c0_264] : memref<1x22x22xf32, #tpu.memory_space<vmem>>, vector<1x16x16xf32>
    %416 = vector.broadcast %67 : f32 to vector<1x16x16xf32>
    %417 = arith.mulf %416, %414 : vector<1x16x16xf32>
    %418 = arith.addf %354, %417 : vector<1x16x16xf32>
    %419 = vector.broadcast %116 : f32 to vector<1x16x16xf32>
    %420 = arith.mulf %419, %415 : vector<1x16x16xf32>
    %421 = arith.addf %357, %420 : vector<1x16x16xf32>
    %c0_265 = arith.constant 0 : index
    %c5_266 = arith.constant 5 : index
    %c1_267 = arith.constant 1 : index
    %422 = vector.load %arg5[%c0_265, %c5_266, %c1_267] : memref<1x22x22xf32, #tpu.memory_space<vmem>>, vector<1x16x16xf32>
    %c0_268 = arith.constant 0 : index
    %c5_269 = arith.constant 5 : index
    %c1_270 = arith.constant 1 : index
    %423 = vector.load %arg6[%c0_268, %c5_269, %c1_270] : memref<1x22x22xf32, #tpu.memory_space<vmem>>, vector<1x16x16xf32>
    %424 = vector.broadcast %68 : f32 to vector<1x16x16xf32>
    %425 = arith.mulf %424, %422 : vector<1x16x16xf32>
    %426 = arith.addf %418, %425 : vector<1x16x16xf32>
    %427 = vector.broadcast %117 : f32 to vector<1x16x16xf32>
    %428 = arith.mulf %427, %423 : vector<1x16x16xf32>
    %429 = arith.addf %421, %428 : vector<1x16x16xf32>
    %c0_271 = arith.constant 0 : index
    %c5_272 = arith.constant 5 : index
    %c2_273 = arith.constant 2 : index
    %430 = vector.load %arg5[%c0_271, %c5_272, %c2_273] : memref<1x22x22xf32, #tpu.memory_space<vmem>>, vector<1x16x16xf32>
    %c0_274 = arith.constant 0 : index
    %c5_275 = arith.constant 5 : index
    %c2_276 = arith.constant 2 : index
    %431 = vector.load %arg6[%c0_274, %c5_275, %c2_276] : memref<1x22x22xf32, #tpu.memory_space<vmem>>, vector<1x16x16xf32>
    %432 = vector.broadcast %69 : f32 to vector<1x16x16xf32>
    %433 = arith.mulf %432, %430 : vector<1x16x16xf32>
    %434 = arith.addf %426, %433 : vector<1x16x16xf32>
    %435 = vector.broadcast %118 : f32 to vector<1x16x16xf32>
    %436 = arith.mulf %435, %431 : vector<1x16x16xf32>
    %437 = arith.addf %429, %436 : vector<1x16x16xf32>
    %c0_277 = arith.constant 0 : index
    %c5_278 = arith.constant 5 : index
    %c3_279 = arith.constant 3 : index
    %438 = vector.load %arg5[%c0_277, %c5_278, %c3_279] : memref<1x22x22xf32, #tpu.memory_space<vmem>>, vector<1x16x16xf32>
    %c0_280 = arith.constant 0 : index
    %c5_281 = arith.constant 5 : index
    %c3_282 = arith.constant 3 : index
    %439 = vector.load %arg6[%c0_280, %c5_281, %c3_282] : memref<1x22x22xf32, #tpu.memory_space<vmem>>, vector<1x16x16xf32>
    %440 = vector.broadcast %70 : f32 to vector<1x16x16xf32>
    %441 = arith.mulf %440, %438 : vector<1x16x16xf32>
    %442 = arith.addf %434, %441 : vector<1x16x16xf32>
    %443 = vector.broadcast %119 : f32 to vector<1x16x16xf32>
    %444 = arith.mulf %443, %439 : vector<1x16x16xf32>
    %445 = arith.addf %437, %444 : vector<1x16x16xf32>
    %c0_283 = arith.constant 0 : index
    %c5_284 = arith.constant 5 : index
    %c4_285 = arith.constant 4 : index
    %446 = vector.load %arg5[%c0_283, %c5_284, %c4_285] : memref<1x22x22xf32, #tpu.memory_space<vmem>>, vector<1x16x16xf32>
    %c0_286 = arith.constant 0 : index
    %c5_287 = arith.constant 5 : index
    %c4_288 = arith.constant 4 : index
    %447 = vector.load %arg6[%c0_286, %c5_287, %c4_288] : memref<1x22x22xf32, #tpu.memory_space<vmem>>, vector<1x16x16xf32>
    %448 = vector.broadcast %71 : f32 to vector<1x16x16xf32>
    %449 = arith.mulf %448, %446 : vector<1x16x16xf32>
    %450 = arith.addf %442, %449 : vector<1x16x16xf32>
    %451 = vector.broadcast %120 : f32 to vector<1x16x16xf32>
    %452 = arith.mulf %451, %447 : vector<1x16x16xf32>
    %453 = arith.addf %445, %452 : vector<1x16x16xf32>
    %c0_289 = arith.constant 0 : index
    %c5_290 = arith.constant 5 : index
    %c5_291 = arith.constant 5 : index
    %454 = vector.load %arg5[%c0_289, %c5_290, %c5_291] : memref<1x22x22xf32, #tpu.memory_space<vmem>>, vector<1x16x16xf32>
    %c0_292 = arith.constant 0 : index
    %c5_293 = arith.constant 5 : index
    %c5_294 = arith.constant 5 : index
    %455 = vector.load %arg6[%c0_292, %c5_293, %c5_294] : memref<1x22x22xf32, #tpu.memory_space<vmem>>, vector<1x16x16xf32>
    %456 = vector.broadcast %72 : f32 to vector<1x16x16xf32>
    %457 = arith.mulf %456, %454 : vector<1x16x16xf32>
    %458 = arith.addf %450, %457 : vector<1x16x16xf32>
    %459 = vector.broadcast %121 : f32 to vector<1x16x16xf32>
    %460 = arith.mulf %459, %455 : vector<1x16x16xf32>
    %461 = arith.addf %453, %460 : vector<1x16x16xf32>
    %c0_295 = arith.constant 0 : index
    %c5_296 = arith.constant 5 : index
    %c6_297 = arith.constant 6 : index
    %462 = vector.load %arg5[%c0_295, %c5_296, %c6_297] : memref<1x22x22xf32, #tpu.memory_space<vmem>>, vector<1x16x16xf32>
    %c0_298 = arith.constant 0 : index
    %c5_299 = arith.constant 5 : index
    %c6_300 = arith.constant 6 : index
    %463 = vector.load %arg6[%c0_298, %c5_299, %c6_300] : memref<1x22x22xf32, #tpu.memory_space<vmem>>, vector<1x16x16xf32>
    %464 = vector.broadcast %73 : f32 to vector<1x16x16xf32>
    %465 = arith.mulf %464, %462 : vector<1x16x16xf32>
    %466 = arith.addf %458, %465 : vector<1x16x16xf32>
    %467 = vector.broadcast %122 : f32 to vector<1x16x16xf32>
    %468 = arith.mulf %467, %463 : vector<1x16x16xf32>
    %469 = arith.addf %461, %468 : vector<1x16x16xf32>
    %c0_301 = arith.constant 0 : index
    %c6_302 = arith.constant 6 : index
    %c0_303 = arith.constant 0 : index
    %470 = vector.load %arg5[%c0_301, %c6_302, %c0_303] : memref<1x22x22xf32, #tpu.memory_space<vmem>>, vector<1x16x16xf32>
    %c0_304 = arith.constant 0 : index
    %c6_305 = arith.constant 6 : index
    %c0_306 = arith.constant 0 : index
    %471 = vector.load %arg6[%c0_304, %c6_305, %c0_306] : memref<1x22x22xf32, #tpu.memory_space<vmem>>, vector<1x16x16xf32>
    %472 = vector.broadcast %74 : f32 to vector<1x16x16xf32>
    %473 = arith.mulf %472, %470 : vector<1x16x16xf32>
    %474 = arith.addf %410, %473 : vector<1x16x16xf32>
    %475 = vector.broadcast %123 : f32 to vector<1x16x16xf32>
    %476 = arith.mulf %475, %471 : vector<1x16x16xf32>
    %477 = arith.addf %413, %476 : vector<1x16x16xf32>
    %c0_307 = arith.constant 0 : index
    %c6_308 = arith.constant 6 : index
    %c1_309 = arith.constant 1 : index
    %478 = vector.load %arg5[%c0_307, %c6_308, %c1_309] : memref<1x22x22xf32, #tpu.memory_space<vmem>>, vector<1x16x16xf32>
    %c0_310 = arith.constant 0 : index
    %c6_311 = arith.constant 6 : index
    %c1_312 = arith.constant 1 : index
    %479 = vector.load %arg6[%c0_310, %c6_311, %c1_312] : memref<1x22x22xf32, #tpu.memory_space<vmem>>, vector<1x16x16xf32>
    %480 = vector.broadcast %75 : f32 to vector<1x16x16xf32>
    %481 = arith.mulf %480, %478 : vector<1x16x16xf32>
    %482 = arith.addf %474, %481 : vector<1x16x16xf32>
    %483 = vector.broadcast %124 : f32 to vector<1x16x16xf32>
    %484 = arith.mulf %483, %479 : vector<1x16x16xf32>
    %485 = arith.addf %477, %484 : vector<1x16x16xf32>
    %c0_313 = arith.constant 0 : index
    %c6_314 = arith.constant 6 : index
    %c2_315 = arith.constant 2 : index
    %486 = vector.load %arg5[%c0_313, %c6_314, %c2_315] : memref<1x22x22xf32, #tpu.memory_space<vmem>>, vector<1x16x16xf32>
    %c0_316 = arith.constant 0 : index
    %c6_317 = arith.constant 6 : index
    %c2_318 = arith.constant 2 : index
    %487 = vector.load %arg6[%c0_316, %c6_317, %c2_318] : memref<1x22x22xf32, #tpu.memory_space<vmem>>, vector<1x16x16xf32>
    %488 = vector.broadcast %76 : f32 to vector<1x16x16xf32>
    %489 = arith.mulf %488, %486 : vector<1x16x16xf32>
    %490 = arith.addf %482, %489 : vector<1x16x16xf32>
    %491 = vector.broadcast %125 : f32 to vector<1x16x16xf32>
    %492 = arith.mulf %491, %487 : vector<1x16x16xf32>
    %493 = arith.addf %485, %492 : vector<1x16x16xf32>
    %c0_319 = arith.constant 0 : index
    %c6_320 = arith.constant 6 : index
    %c3_321 = arith.constant 3 : index
    %494 = vector.load %arg5[%c0_319, %c6_320, %c3_321] : memref<1x22x22xf32, #tpu.memory_space<vmem>>, vector<1x16x16xf32>
    %c0_322 = arith.constant 0 : index
    %c6_323 = arith.constant 6 : index
    %c3_324 = arith.constant 3 : index
    %495 = vector.load %arg6[%c0_322, %c6_323, %c3_324] : memref<1x22x22xf32, #tpu.memory_space<vmem>>, vector<1x16x16xf32>
    %496 = vector.broadcast %77 : f32 to vector<1x16x16xf32>
    %497 = arith.mulf %496, %494 : vector<1x16x16xf32>
    %498 = arith.addf %490, %497 : vector<1x16x16xf32>
    %499 = vector.broadcast %126 : f32 to vector<1x16x16xf32>
    %500 = arith.mulf %499, %495 : vector<1x16x16xf32>
    %501 = arith.addf %493, %500 : vector<1x16x16xf32>
    %c0_325 = arith.constant 0 : index
    %c6_326 = arith.constant 6 : index
    %c4_327 = arith.constant 4 : index
    %502 = vector.load %arg5[%c0_325, %c6_326, %c4_327] : memref<1x22x22xf32, #tpu.memory_space<vmem>>, vector<1x16x16xf32>
    %c0_328 = arith.constant 0 : index
    %c6_329 = arith.constant 6 : index
    %c4_330 = arith.constant 4 : index
    %503 = vector.load %arg6[%c0_328, %c6_329, %c4_330] : memref<1x22x22xf32, #tpu.memory_space<vmem>>, vector<1x16x16xf32>
    %504 = vector.broadcast %78 : f32 to vector<1x16x16xf32>
    %505 = arith.mulf %504, %502 : vector<1x16x16xf32>
    %506 = arith.addf %498, %505 : vector<1x16x16xf32>
    %507 = vector.broadcast %127 : f32 to vector<1x16x16xf32>
    %508 = arith.mulf %507, %503 : vector<1x16x16xf32>
    %509 = arith.addf %501, %508 : vector<1x16x16xf32>
    %c0_331 = arith.constant 0 : index
    %c6_332 = arith.constant 6 : index
    %c5_333 = arith.constant 5 : index
    %510 = vector.load %arg5[%c0_331, %c6_332, %c5_333] : memref<1x22x22xf32, #tpu.memory_space<vmem>>, vector<1x16x16xf32>
    %c0_334 = arith.constant 0 : index
    %c6_335 = arith.constant 6 : index
    %c5_336 = arith.constant 5 : index
    %511 = vector.load %arg6[%c0_334, %c6_335, %c5_336] : memref<1x22x22xf32, #tpu.memory_space<vmem>>, vector<1x16x16xf32>
    %512 = vector.broadcast %79 : f32 to vector<1x16x16xf32>
    %513 = arith.mulf %512, %510 : vector<1x16x16xf32>
    %514 = arith.addf %506, %513 : vector<1x16x16xf32>
    %515 = vector.broadcast %128 : f32 to vector<1x16x16xf32>
    %516 = arith.mulf %515, %511 : vector<1x16x16xf32>
    %517 = arith.addf %509, %516 : vector<1x16x16xf32>
    %c0_337 = arith.constant 0 : index
    %c6_338 = arith.constant 6 : index
    %c6_339 = arith.constant 6 : index
    %518 = vector.load %arg5[%c0_337, %c6_338, %c6_339] : memref<1x22x22xf32, #tpu.memory_space<vmem>>, vector<1x16x16xf32>
    %c0_340 = arith.constant 0 : index
    %c6_341 = arith.constant 6 : index
    %c6_342 = arith.constant 6 : index
    %519 = vector.load %arg6[%c0_340, %c6_341, %c6_342] : memref<1x22x22xf32, #tpu.memory_space<vmem>>, vector<1x16x16xf32>
    %520 = vector.broadcast %80 : f32 to vector<1x16x16xf32>
    %521 = arith.mulf %520, %518 : vector<1x16x16xf32>
    %522 = arith.addf %514, %521 : vector<1x16x16xf32>
    %523 = vector.broadcast %129 : f32 to vector<1x16x16xf32>
    %524 = arith.mulf %523, %519 : vector<1x16x16xf32>
    %525 = arith.addf %517, %524 : vector<1x16x16xf32>
    %526 = arith.addf %522, %525 : vector<1x16x16xf32>
    %527 = arith.addf %466, %469 : vector<1x16x16xf32>
    %528 = arith.addf %526, %527 : vector<1x16x16xf32>
    %c0_343 = arith.constant 0 : index
    %529 = memref.load %arg2[%c0_343] : memref<1xf32, #tpu.memory_space<smem>>
    %530 = vector.broadcast %529 : f32 to vector<1x16x16xf32>
    %531 = arith.addf %528, %530 : vector<1x16x16xf32>
    %532 = arith.negf %531 : vector<1x16x16xf32>
    %533 = math.exp %532 : vector<1x16x16xf32>
    %cst_344 = arith.constant 1.000000e+00 : f32
    %534 = vector.broadcast %cst_344 : f32 to vector<1x16x16xf32>
    %535 = arith.addf %534, %533 : vector<1x16x16xf32>
    %536 = arith.divf %534, %535 : vector<1x16x16xf32>
    %537 = vector.shape_cast %536 : vector<1x16x16xf32> to vector<1x256xf32>
    %c0_345 = arith.constant 0 : index
    %c0_346 = arith.constant 0 : index
    %c0_347 = arith.constant 0 : index
    %538 = vector.load %arg3[%c0_345, %c0_346, %c0_347] : memref<1x4x256xf32, #tpu.memory_space<vmem>>, vector<1x4x256xf32>
    %539 = vector.shape_cast %537 : vector<1x256xf32> to vector<1x1x256xf32>
    %540 = vector.broadcast %539 : vector<1x1x256xf32> to vector<1x4x256xf32>
    %541 = arith.mulf %538, %540 : vector<1x4x256xf32>
    %c0_348 = arith.constant 0 : index
    %c0_349 = arith.constant 0 : index
    %c0_350 = arith.constant 0 : index
    %542 = vector.load %arg4[%c0_348, %c0_349, %c0_350] : memref<1x4x256xf32, #tpu.memory_space<vmem>>, vector<1x4x256xf32>
    tpu.vector_store %arg4[%c0_348, %c0_349, %c0_350], %541 {strides = array<i32>} : memref<1x4x256xf32, #tpu.memory_space<vmem>>, vector<1x4x256xf32>,
    return
  }
  func.func @transform_0(%arg0: i32, %arg1: memref<98xf32, #tpu.memory_space<smem>>, %arg2: memref<1xf32, #tpu.memory_space<smem>>) -> (i32, i32, i32) {
    %c0_i32 = arith.constant 0 : i32
    %c0_i32_0 = arith.constant 0 : i32
    %c0_i32_1 = arith.constant 0 : i32
    return %arg0, %c0_i32, %c0_i32_0 : i32, i32, i32
  }
  func.func @transform_1(%arg0: i32, %arg1: memref<98xf32, #tpu.memory_space<smem>>, %arg2: memref<1xf32, #tpu.memory_space<smem>>) -> (i32, i32, i32) {
    %c0_i32 = arith.constant 0 : i32
    %c0_i32_0 = arith.constant 0 : i32
    %c0_i32_1 = arith.constant 0 : i32
    return %arg0, %c0_i32, %c0_i32_0 : i32, i32, i32
  }
}

</mosaic_0001>

<llo_original>
// kernel: tpu_custom_call.1
$region0: #{tpu_custom_call.1}
  #allocation0 [shape = 'u32[]', space=smem, size = 0x4, offset = 0x4, fixed_abs, tag = 'smem constant byte address 0x4 - core index']
  #allocation1 [shape = 'u32[144,128]{1,0:T(1,128)}', space=vmem, size = 0x12000, scoped, tag = 'internal scratch']
  #allocation2 [shape = 'f32[1,22,22]{2,1,0:T(8,128)}', space=vmem, size = 0x3000, scoped, tag = 'scratch operand']
  #allocation3 [shape = 'f32[1,22,22]{2,1,0:T(8,128)}', space=vmem, size = 0x3000, scoped, tag = 'scratch operand']
  #allocation4 [shape = 's32[1]{0}', space=sflag, size = 0x4, scoped, tag = 'scoped memory for tpu_custom_call.1']
  #allocation5 [shape = 'u8[512]{0}', space=smem, size = 0x200, scoped, tag = 'prefetched SMEM operand 0']
  #allocation6 [shape = 'f32[1]{0:T(128)S(6)}', space=smem, size = 0x200, scoped, tag = 'prefetched SMEM operand 1']
  %s0 = inlined_call_operand.vmem [shape: f32[98], index: 0, kind: input, shape index: {}]
  %s1 = inlined_call_operand.<no memory space> [shape: f32[1], index: 1, kind: input, shape index: {}]
  %s2 = inlined_call_operand.hbm [shape: f32[2,4,256], index: 2, kind: input, shape index: {}]
  %s3 = inlined_call_operand.hbm [shape: f32[2,4,256], index: 3, kind: output, shape index: {}]
  %s4 = sld [smem:[#allocation0]]
  $region41: #{tpu_custom_call.1} parent=0
    _
  %s6 = ssub.s32 1, %s4
  %s7 = scalar_select 0, %s6, %s4
  %s8 = sshll.u32 %s0, 4
  %s9 = int_to_ptr.vmem [resolvable:$true] %s8
  %11 = dma.vmem_to_smem %s9, 16, [#allocation5], [#allocation4]
  %12 = sst [smem:[#allocation6]] %s1
  %13 = dma.done [#allocation4], 16
  %14 = sfence
  $region1: #{tpu_custom_call.1} parent=0
    #allocation7 [shape = 'u8[8192]{0}', space=vmem, size = 0x2000, scoped, tag = 'input window, operand 2']
    #allocation8 [shape = 's32[2]{0}', space=sflag, size = 0x8, scoped, tag = 'scoped memory for tpu_custom_call.1']
    #allocation9 [shape = 's32[2]{0}', space=sflag, size = 0x8, scoped, tag = 'scoped memory for tpu_custom_call.1']
    #allocation10 [shape = 'u8[8192]{0}', space=vmem, size = 0x2000, scoped, tag = 'output window, operand 0']
    %15 = vsyncpa [#allocation8], 0
    %s16 = scalar_lea.sflag [#allocation8], 1
    %17 = vsyncpa %s16, 0
    %18 = vsyncpa [#allocation9], 0
    %s19 = scalar_lea.sflag [#allocation9], 1
    %20 = vsyncpa %s19, 0
    loop: start=0, step=1, limit=4
    $region2: #{tpu_custom_call.1} parent=1 // loop_pre_header
      _
    $region3: #{tpu_custom_call.1} parent=1 // loop_header
      %s22 = sphi 0, %s26
      %p23 = scmp.ge.s32.totalorder %s22, 4
      %s32 = sphi 0, %s34
      %s35 = sphi 0, %s32
      %s36 = sphi 0, %s35
      %s52 = sphi 0, %s36
      %s58 = sphi 0, %s60
      %s61 = sphi 0, %s58
      %s62 = sphi 0, %s61
      %s78 = sphi 0, %s62
    $region4: #{tpu_custom_call.1} parent=1 // loop_header_branch
      %25 = sbr.rel (%p23) target = $region8
    $region5: #{tpu_custom_call.1} parent=1 // loop_body
      %s27 = ssub.s32 %s22, 1
      %s28 = ssub.s32 %s22, 2
      %s29 = sadd.s32 %s22, 1
      %s30 = ssub.s32 %s22, %s29
      %p31 = scmp.eq.s32.totalorder %s30, 0
      %s33 = sadd.s32 %s32, 1
      %s34 = scalar_select %p31, %s32, %s33
      %p37 = pneg %p31
      %p38 = scmp.eq.s32.totalorder %s22, 1
      %p39 = por %p37, %p38
      %p40 = scmp.ne.s32.totalorder %s32, %s35
      %p41 = scmp.eq.s32.totalorder %s22, 0
      %p42 = por %p40, %p41
      %p43 = scmp.ne.s32.totalorder %s32, %s35
      %p44 = scmp.eq.s32.totalorder %s27, 1
      %p45 = por %p43, %p44
      %p46 = scmp.ne.s32.totalorder %s35, %s36
      %p47 = scmp.eq.s32.totalorder %s27, 0
      %p48 = por %p46, %p47
      %p49 = scmp.ne.s32.totalorder %s35, %s36
      %p50 = scmp.eq.s32.totalorder %s28, 1
      %p51 = por %p49, %p50
      %p53 = scmp.ne.s32.totalorder %s36, %s52
      %p54 = scmp.eq.s32.totalorder %s28, 0
      %p55 = por %p53, %p54
      %s56 = ssub.s32 %s22, %s29
      %p57 = scmp.eq.s32.totalorder %s56, 0
      %s59 = sadd.s32 %s58, 1
      %s60 = scalar_select %p57, %s58, %s59
      %p63 = pneg %p57
      %p64 = scmp.eq.s32.totalorder %s22, 1
      %p65 = por %p63, %p64
      %p66 = scmp.ne.s32.totalorder %s58, %s61
      %p67 = scmp.eq.s32.totalorder %s22, 0
      %p68 = por %p66, %p67
      %p69 = scmp.ne.s32.totalorder %s58, %s61
      %p70 = scmp.eq.s32.totalorder %s27, 1
      %p71 = por %p69, %p70
      %p72 = scmp.ne.s32.totalorder %s61, %s62
      %p73 = scmp.eq.s32.totalorder %s27, 0
      %p74 = por %p72, %p73
      %p75 = scmp.ne.s32.totalorder %s61, %s62
      %p76 = scmp.eq.s32.totalorder %s28, 1
      %p77 = por %p75, %p76
      %p79 = scmp.ne.s32.totalorder %s62, %s78
      %p80 = scmp.eq.s32.totalorder %s28, 0
      %p81 = por %p79, %p80
      %p82 = scmp.le.s32.totalorder 1, %s22
      %p83 = scmp.lt.s32.totalorder %s22, 3
      %p84 = pnand %p82, %p83
      %p85 = pneg %p84
      // Predicated region
      $region9: #{tpu_custom_call.1} parent=5 // pred_check
        _
      $region10: #{tpu_custom_call.1} parent=5 // pred_check_branch
        %87 = sbr.rel (%p84) target = $region12
      $region11: #{tpu_custom_call.1} parent=5 // pred_region
        %s88 = ssub.s32 %s22, 1
      $region12: #{tpu_custom_call.1} parent=5 // pred_fallthru
        _
      %p89 = scmp.lt.s32.totalorder %s22, 2
      // Predicated region
      $region13: #{tpu_custom_call.1} parent=5 // pred_check
        %p90 = pneg %p89
      $region14: #{tpu_custom_call.1} parent=5 // pred_check_branch
        %92 = sbr.rel (%p90) target = $region16
      $region15: #{tpu_custom_call.1} parent=5 // pred_region
        // Predicated region
        $region17: #{tpu_custom_call.1} parent=15 // pred_check
          %p93 = pneg %p42
        $region18: #{tpu_custom_call.1} parent=15 // pred_check_branch
          %95 = sbr.rel (%p93) target = $region20
        $region19: #{tpu_custom_call.1} parent=15 // pred_region
          %s96 = sand.u32 %s32, 1
          %s97 = scalar_lea.sflag [#allocation8], %s96
          %s98 = sand.u32 %s32, 1
          %s99 = smul.addr %s98, 8
          %s100 = scalar_lea.vmem [#allocation7], %s99
          %s102 = ssub.s32 128, 128
          %103 = vsyncadd %s97, %s102
          %s104 = smul.addr %s22, 2
          %s105 = smul.addr %s104, 64
          %s106 = scalar_lea.hbm %s2, %s105
          %s108 = sshll.u32 %s100, 4
          %s109 = int_to_ptr.vmem [resolvable:$true] %s108
          %111 = dma.hbm_to_vmem [thread:$0]  %s106, 128, %s109, %s97
        $region20: #{tpu_custom_call.1} parent=15 // pred_fallthru
          _
      $region16: #{tpu_custom_call.1} parent=5 // pred_fallthru
        _
      %p112 = scmp.le.s32.totalorder 1, %s22
      %p113 = scmp.lt.s32.totalorder %s22, 3
      %p114 = pnand %p112, %p113
      %p115 = pneg %p114
      // Predicated region
      $region21: #{tpu_custom_call.1} parent=5 // pred_check
        _
      $region22: #{tpu_custom_call.1} parent=5 // pred_check_branch
        %117 = sbr.rel (%p114) target = $region24
      $region23: #{tpu_custom_call.1} parent=5 // pred_region
        %s118 = ssub.s32 %s22, 1
        %s119 = sand.u32 %s35, 1
        %s120 = scalar_lea.sflag [#allocation8], %s119
        %s121 = sand.u32 %s35, 1
        %s122 = smul.addr %s121, 8
        %s123 = scalar_lea.vmem [#allocation7], %s122
        // Predicated region
        $region25: #{tpu_custom_call.1} parent=23 // pred_check
          %p124 = pneg %p48
        $region26: #{tpu_custom_call.1} parent=23 // pred_check_branch
          %126 = sbr.rel (%p124) target = $region28
        $region27: #{tpu_custom_call.1} parent=23 // pred_region
          %127 = dma.done %s120, 128
        $region28: #{tpu_custom_call.1} parent=23 // pred_fallthru
          _
        %s128 = sand.u32 %s35, 1
        %s129 = scalar_lea.sflag [#allocation8], %s128
        %s130 = sand.u32 %s35, 1
        %s131 = smul.addr %s130, 8
        %s132 = scalar_lea.vmem [#allocation7], %s131
        %p133 = pneg %p48
        %p134 = pneg %p45
        %p135 = pneg %p74
        %p136 = pneg %p71
        %s137 = sand.u32 %s61, 1
        %s138 = scalar_lea.sflag [#allocation9], %s137
        %s139 = sand.u32 %s61, 1
        %s140 = smul.addr %s139, 8
        %s141 = scalar_lea.vmem [#allocation10], %s140
        %v142 = vld [vmem:[%s123] ss:$4 sm:$0x3]
        %s143 = scalar_lea.vmem %s123, 1 [#allocation7]
        %v144 = vld [vmem:[%s143] ss:$4 sm:$0x3]
        %v145 = vadd.f32 %v144, 0.0
        %v146 = vmax.f32 %v142, %v144
        %s147 = scalar_lea.vmem %s123, 2 [#allocation7]
        %v148 = vld [vmem:[%s147] ss:$4 sm:$0x3]
        %v149 = vadd.f32 %v142, %v148
        %v150 = vmax.f32 %v146, %v148
        %s151 = scalar_lea.vmem %s123, 3 [#allocation7]
        %v152 = vld [vmem:[%s151] ss:$4 sm:$0x3]
        %v153 = vadd.f32 %v145, %v152
        %v154 = vmax.f32 %v150, %v152
        %v155 = vadd.f32 %v149, %v153
        %v156 = vmul.f32 %v155, 0.25
        %vm157 = vcmask 174080
        %158 = vst.msk [vmem:[#allocation2] sm:$0x7] %vm157, 0.0
        %159 = vst.msk [vmem:[#allocation2 + $0x13] sm:$0x7] %vm157, 0.0
        %vm160 = vcmask 23552
        %161 = vst.msk [vmem:[#allocation2 + $0x3] sm:$0xff] %vm160, 0.0
        %162 = vst.msk [vmem:[#allocation2 + $0xb] sm:$0xff] %vm160, 0.0
        %vm163 = vcmask 179352
        %164 = vst.msk [vmem:[#allocation2 + $0x3] sm:$0xff] %vm163, 0.0
        %165 = vst.msk [vmem:[#allocation2 + $0xb] sm:$0xff] %vm163, 0.0
        %166 = vst.msk [vmem:[#allocation3] sm:$0x7] %vm157, 0.0
        %167 = vst.msk [vmem:[#allocation3 + $0x13] sm:$0x7] %vm157, 0.0
        %168 = vst.msk [vmem:[#allocation3 + $0x3] sm:$0xff] %vm160, 0.0
        %169 = vst.msk [vmem:[#allocation3 + $0xb] sm:$0xff] %vm160, 0.0
        %170 = vst.msk [vmem:[#allocation3 + $0x3] sm:$0xff] %vm163, 0.0
        %171 = vst.msk [vmem:[#allocation3 + $0xb] sm:$0xff] %vm163, 0.0
        %v173 = vrot.slane %v156, 1
        %174 = vrot.lane.b32.xlu0 %v156, 112
        %v175 = vpop.permute.xlu0 %174
        %v176 = vrot.slane %v175, 1
        %177 = vrot.lane.b32.xlu0 %v156, 96
        %v178 = vpop.permute.xlu0 %177
        %v179 = vrot.slane %v178, 1
        %180 = vrot.lane.b32.xlu0 %v156, 80
        %v181 = vpop.permute.xlu0 %180
        %v182 = vrot.slane %v181, 1
        %183 = vrot.lane.b32.xlu0 %v156, 64
        %v184 = vpop.permute.xlu0 %183
        %v185 = vrot.slane %v184, 1
        %186 = vrot.lane.b32.xlu0 %v156, 48
        %v187 = vpop.permute.xlu0 %186
        %v188 = vrot.slane %v187, 1
        %189 = vrot.lane.b32.xlu0 %v156, 32
        %v190 = vpop.permute.xlu0 %189
        %v191 = vrot.slane %v190, 1
        %192 = vrot.lane.b32.xlu0 %v156, 16
        %v193 = vpop.permute.xlu0 %192
        %v194 = vrot.slane %v193, 1
        %v195 = vcombine.low %v156, %v175
        %v196 = vcombine.low %v178, %v181
        %v197 = vcombine.low %v184, %v187
        %v198 = vcombine.low %v190, %v193
        %v200 = vunpack.c.l.s4 1966171168
        %v201 = vunpack.c.0.s8 %v200
        %v202 = vlaneseq
        %v203 = vshrl.u32 %v202, 7
        %v204 = vsub.s32 %v201, %v203
        %v205 = vrot.slane %v195, %v204
        %v207 = vunpack.c.l.s4 1966171168
        %v208 = vunpack.c.0.s8 %v207
        %v209 = vlaneseq
        %v210 = vshrl.u32 %v209, 7
        %v211 = vsub.s32 %v208, %v210
        %v212 = vrot.slane %v196, %v211
        %v214 = vunpack.c.l.s4 1966171168
        %v215 = vunpack.c.0.s8 %v214
        %v216 = vlaneseq
        %v217 = vshrl.u32 %v216, 7
        %v218 = vsub.s32 %v215, %v217
        %v219 = vrot.slane %v197, %v218
        %v221 = vunpack.c.l.s4 1966171168
        %v222 = vunpack.c.0.s8 %v221
        %v223 = vlaneseq
        %v224 = vshrl.u32 %v223, 7
        %v225 = vsub.s32 %v222, %v224
        %v226 = vrot.slane %v198, %v225
        %v227 = vcombine.low %v205, %v212
        %v228 = vcombine.low %v219, %v226
        %v230 = vunpack.c.l.s4 1966171168
        %v231 = vunpack.c.0.s8 %v230
        %v232 = vlaneseq
        %v233 = vshrl.u32 %v232, 7
        %v234 = vsub.s32 %v231, %v233
        %v235 = vrot.slane %v227, %v234
        %v237 = vunpack.c.l.s4 1966171168
        %v238 = vunpack.c.0.s8 %v237
        %v239 = vlaneseq
        %v240 = vshrl.u32 %v239, 7
        %v241 = vsub.s32 %v238, %v240
        %v242 = vrot.slane %v228, %v241
        %v243 = vcombine.low %v235, %v242
        %v244 = vcombine.low %v173, %v176
        %v245 = vcombine.low %v179, %v182
        %v246 = vcombine.low %v185, %v188
        %v247 = vcombine.low %v191, %v194
        %v249 = vunpack.c.l.s4 1966171168
        %v250 = vunpack.c.0.s8 %v249
        %v251 = vlaneseq
        %v252 = vshrl.u32 %v251, 7
        %v253 = vsub.s32 %v250, %v252
        %v254 = vrot.slane %v244, %v253
        %v256 = vunpack.c.l.s4 1966171168
        %v257 = vunpack.c.0.s8 %v256
        %v258 = vlaneseq
        %v259 = vshrl.u32 %v258, 7
        %v260 = vsub.s32 %v257, %v259
        %v261 = vrot.slane %v245, %v260
        %v263 = vunpack.c.l.s4 1966171168
        %v264 = vunpack.c.0.s8 %v263
        %v265 = vlaneseq
        %v266 = vshrl.u32 %v265, 7
        %v267 = vsub.s32 %v264, %v266
        %v268 = vrot.slane %v246, %v267
        %v270 = vunpack.c.l.s4 1966171168
        %v271 = vunpack.c.0.s8 %v270
        %v272 = vlaneseq
        %v273 = vshrl.u32 %v272, 7
        %v274 = vsub.s32 %v271, %v273
        %v275 = vrot.slane %v247, %v274
        %v276 = vcombine.low %v254, %v261
        %v277 = vcombine.low %v268, %v275
        %v279 = vunpack.c.l.s4 1966171168
        %v280 = vunpack.c.0.s8 %v279
        %v281 = vlaneseq
        %v282 = vshrl.u32 %v281, 7
        %v283 = vsub.s32 %v280, %v282
        %v284 = vrot.slane %v276, %v283
        %v286 = vunpack.c.l.s4 1966171168
        %v287 = vunpack.c.0.s8 %v286
        %v288 = vlaneseq
        %v289 = vshrl.u32 %v288, 7
        %v290 = vsub.s32 %v287, %v289
        %v291 = vrot.slane %v277, %v290
        %v292 = vcombine.low %v284, %v291
        %293 = vrot.lane.b32.xlu0 %v243, 3
        %v294 = vpop.permute.xlu0 %293
        %295 = vrot.lane.b32.xlu0 %v292, 3
        %v296 = vpop.permute.xlu0 %295
        %vm299 = vcmask 154648
        %300 = vst.msk [vmem:[#allocation2 + $0x3] sm:$0xff] %vm299, %v294
        %301 = vst.msk [vmem:[#allocation2 + $0xb] sm:$0xff] %vm299, %v296
        %v303 = vrot.slane %v154, 1
        %304 = vrot.lane.b32.xlu0 %v154, 112
        %v305 = vpop.permute.xlu0 %304
        %v306 = vrot.slane %v305, 1
        %307 = vrot.lane.b32.xlu0 %v154, 96
        %v308 = vpop.permute.xlu0 %307
        %v309 = vrot.slane %v308, 1
        %310 = vrot.lane.b32.xlu0 %v154, 80
        %v311 = vpop.permute.xlu0 %310
        %v312 = vrot.slane %v311, 1
        %313 = vrot.lane.b32.xlu0 %v154, 64
        %v314 = vpop.permute.xlu0 %313
        %v315 = vrot.slane %v314, 1
        %316 = vrot.lane.b32.xlu0 %v154, 48
        %v317 = vpop.permute.xlu0 %316
        %v318 = vrot.slane %v317, 1
        %319 = vrot.lane.b32.xlu0 %v154, 32
        %v320 = vpop.permute.xlu0 %319
        %v321 = vrot.slane %v320, 1
        %322 = vrot.lane.b32.xlu0 %v154, 16
        %v323 = vpop.permute.xlu0 %322
        %v324 = vrot.slane %v323, 1
        %v325 = vcombine.low %v154, %v305
        %v326 = vcombine.low %v308, %v311
        %v327 = vcombine.low %v314, %v317
        %v328 = vcombine.low %v320, %v323
        %v330 = vunpack.c.l.s4 1966171168
        %v331 = vunpack.c.0.s8 %v330
        %v332 = vlaneseq
        %v333 = vshrl.u32 %v332, 7
        %v334 = vsub.s32 %v331, %v333
        %v335 = vrot.slane %v325, %v334
        %v337 = vunpack.c.l.s4 1966171168
        %v338 = vunpack.c.0.s8 %v337
        %v339 = vlaneseq
        %v340 = vshrl.u32 %v339, 7
        %v341 = vsub.s32 %v338, %v340
        %v342 = vrot.slane %v326, %v341
        %v344 = vunpack.c.l.s4 1966171168
        %v345 = vunpack.c.0.s8 %v344
        %v346 = vlaneseq
        %v347 = vshrl.u32 %v346, 7
        %v348 = vsub.s32 %v345, %v347
        %v349 = vrot.slane %v327, %v348
        %v351 = vunpack.c.l.s4 1966171168
        %v352 = vunpack.c.0.s8 %v351
        %v353 = vlaneseq
        %v354 = vshrl.u32 %v353, 7
        %v355 = vsub.s32 %v352, %v354
        %v356 = vrot.slane %v328, %v355
        %v357 = vcombine.low %v335, %v342
        %v358 = vcombine.low %v349, %v356
        %v360 = vunpack.c.l.s4 1966171168
        %v361 = vunpack.c.0.s8 %v360
        %v362 = vlaneseq
        %v363 = vshrl.u32 %v362, 7
        %v364 = vsub.s32 %v361, %v363
        %v365 = vrot.slane %v357, %v364
        %v367 = vunpack.c.l.s4 1966171168
        %v368 = vunpack.c.0.s8 %v367
        %v369 = vlaneseq
        %v370 = vshrl.u32 %v369, 7
        %v371 = vsub.s32 %v368, %v370
        %v372 = vrot.slane %v358, %v371
        %v373 = vcombine.low %v365, %v372
        %v374 = vcombine.low %v303, %v306
        %v375 = vcombine.low %v309, %v312
        %v376 = vcombine.low %v315, %v318
        %v377 = vcombine.low %v321, %v324
        %v379 = vunpack.c.l.s4 1966171168
        %v380 = vunpack.c.0.s8 %v379
        %v381 = vlaneseq
        %v382 = vshrl.u32 %v381, 7
        %v383 = vsub.s32 %v380, %v382
        %v384 = vrot.slane %v374, %v383
        %v386 = vunpack.c.l.s4 1966171168
        %v387 = vunpack.c.0.s8 %v386
        %v388 = vlaneseq
        %v389 = vshrl.u32 %v388, 7
        %v390 = vsub.s32 %v387, %v389
        %v391 = vrot.slane %v375, %v390
        %v393 = vunpack.c.l.s4 1966171168
        %v394 = vunpack.c.0.s8 %v393
        %v395 = vlaneseq
        %v396 = vshrl.u32 %v395, 7
        %v397 = vsub.s32 %v394, %v396
        %v398 = vrot.slane %v376, %v397
        %v400 = vunpack.c.l.s4 1966171168
        %v401 = vunpack.c.0.s8 %v400
        %v402 = vlaneseq
        %v403 = vshrl.u32 %v402, 7
        %v404 = vsub.s32 %v401, %v403
        %v405 = vrot.slane %v377, %v404
        %v406 = vcombine.low %v384, %v391
        %v407 = vcombine.low %v398, %v405
        %v409 = vunpack.c.l.s4 1966171168
        %v410 = vunpack.c.0.s8 %v409
        %v411 = vlaneseq
        %v412 = vshrl.u32 %v411, 7
        %v413 = vsub.s32 %v410, %v412
        %v414 = vrot.slane %v406, %v413
        %v416 = vunpack.c.l.s4 1966171168
        %v417 = vunpack.c.0.s8 %v416
        %v418 = vlaneseq
        %v419 = vshrl.u32 %v418, 7
        %v420 = vsub.s32 %v417, %v419
        %v421 = vrot.slane %v407, %v420
        %v422 = vcombine.low %v414, %v421
        %423 = vrot.lane.b32.xlu0 %v373, 3
        %v424 = vpop.permute.xlu0 %423
        %425 = vrot.lane.b32.xlu0 %v422, 3
        %v426 = vpop.permute.xlu0 %425
        %429 = vst.msk [vmem:[#allocation3 + $0x3] sm:$0xff] %vm299, %v424
        %430 = vst.msk [vmem:[#allocation3 + $0xb] sm:$0xff] %vm299, %v426
        %s431 = sld [smem:[#allocation5]]
        %s432 = sld [smem:[#allocation5 + $0x1]]
        %s433 = sld [smem:[#allocation5 + $0x2]]
        %s434 = sld [smem:[#allocation5 + $0x3]]
        %s435 = sld [smem:[#allocation5 + $0x4]]
        %s436 = sld [smem:[#allocation5 + $0x5]]
        %s437 = sld [smem:[#allocation5 + $0x6]]
        %s438 = sld [smem:[#allocation5 + $0x7]]
        %s439 = sld [smem:[#allocation5 + $0x8]]
        %s440 = sld [smem:[#allocation5 + $0x9]]
        %s441 = sld [smem:[#allocation5 + $0xa]]
        %s442 = sld [smem:[#allocation5 + $0xb]]
        %s443 = sld [smem:[#allocation5 + $0xc]]
        %s444 = sld [smem:[#allocation5 + $0xd]]
        %s445 = sld [smem:[#allocation5 + $0xe]]
        %s446 = sld [smem:[#allocation5 + $0xf]]
        %s447 = sld [smem:[#allocation5 + $0x10]]
        %s448 = sld [smem:[#allocation5 + $0x11]]
        %s449 = sld [smem:[#allocation5 + $0x12]]
        %s450 = sld [smem:[#allocation5 + $0x13]]
        %s451 = sld [smem:[#allocation5 + $0x14]]
        %s452 = sld [smem:[#allocation5 + $0x15]]
        %s453 = sld [smem:[#allocation5 + $0x16]]
        %s454 = sld [smem:[#allocation5 + $0x17]]
        %s455 = sld [smem:[#allocation5 + $0x18]]
        %s456 = sld [smem:[#allocation5 + $0x19]]
        %s457 = sld [smem:[#allocation5 + $0x1a]]
        %s458 = sld [smem:[#allocation5 + $0x1b]]
        %s459 = sld [smem:[#allocation5 + $0x1c]]
        %s460 = sld [smem:[#allocation5 + $0x1d]]
        %s461 = sld [smem:[#allocation5 + $0x1e]]
        %s462 = sld [smem:[#allocation5 + $0x1f]]
        %s463 = sld [smem:[#allocation5 + $0x20]]
        %s464 = sld [smem:[#allocation5 + $0x21]]
        %s465 = sld [smem:[#allocation5 + $0x22]]
        %s466 = sld [smem:[#allocation5 + $0x23]]
        %s467 = sld [smem:[#allocation5 + $0x24]]
        %s468 = sld [smem:[#allocation5 + $0x25]]
        %s469 = sld [smem:[#allocation5 + $0x26]]
        %s470 = sld [smem:[#allocation5 + $0x27]]
        %s471 = sld [smem:[#allocation5 + $0x28]]
        %s472 = sld [smem:[#allocation5 + $0x29]]
        %s473 = sld [smem:[#allocation5 + $0x2a]]
        %s474 = sld [smem:[#allocation5 + $0x2b]]
        %s475 = sld [smem:[#allocation5 + $0x2c]]
        %s476 = sld [smem:[#allocation5 + $0x2d]]
        %s477 = sld [smem:[#allocation5 + $0x2e]]
        %s478 = sld [smem:[#allocation5 + $0x2f]]
        %s479 = sld [smem:[#allocation5 + $0x30]]
        %s480 = sld [smem:[#allocation5 + $0x31]]
        %s481 = sld [smem:[#allocation5 + $0x32]]
        %s482 = sld [smem:[#allocation5 + $0x33]]
        %s483 = sld [smem:[#allocation5 + $0x34]]
        %s484 = sld [smem:[#allocation5 + $0x35]]
        %s485 = sld [smem:[#allocation5 + $0x36]]
        %s486 = sld [smem:[#allocation5 + $0x37]]
        %s487 = sld [smem:[#allocation5 + $0x38]]
        %s488 = sld [smem:[#allocation5 + $0x39]]
        %s489 = sld [smem:[#allocation5 + $0x3a]]
        %s490 = sld [smem:[#allocation5 + $0x3b]]
        %s491 = sld [smem:[#allocation5 + $0x3c]]
        %s492 = sld [smem:[#allocation5 + $0x3d]]
        %s493 = sld [smem:[#allocation5 + $0x3e]]
        %s494 = sld [smem:[#allocation5 + $0x3f]]
        %s495 = sld [smem:[#allocation5 + $0x40]]
        %s496 = sld [smem:[#allocation5 + $0x41]]
        %s497 = sld [smem:[#allocation5 + $0x42]]
        %s498 = sld [smem:[#allocation5 + $0x43]]
        %s499 = sld [smem:[#allocation5 + $0x44]]
        %s500 = sld [smem:[#allocation5 + $0x45]]
        %s501 = sld [smem:[#allocation5 + $0x46]]
        %s502 = sld [smem:[#allocation5 + $0x47]]
        %s503 = sld [smem:[#allocation5 + $0x48]]
        %s504 = sld [smem:[#allocation5 + $0x49]]
        %s505 = sld [smem:[#allocation5 + $0x4a]]
        %s506 = sld [smem:[#allocation5 + $0x4b]]
        %s507 = sld [smem:[#allocation5 + $0x4c]]
        %s508 = sld [smem:[#allocation5 + $0x4d]]
        %s509 = sld [smem:[#allocation5 + $0x4e]]
        %s510 = sld [smem:[#allocation5 + $0x4f]]
        %s511 = sld [smem:[#allocation5 + $0x50]]
        %s512 = sld [smem:[#allocation5 + $0x51]]
        %s513 = sld [smem:[#allocation5 + $0x52]]
        %s514 = sld [smem:[#allocation5 + $0x53]]
        %s515 = sld [smem:[#allocation5 + $0x54]]
        %s516 = sld [smem:[#allocation5 + $0x55]]
        %s517 = sld [smem:[#allocation5 + $0x56]]
        %s518 = sld [smem:[#allocation5 + $0x57]]
        %s519 = sld [smem:[#allocation5 + $0x58]]
        %s520 = sld [smem:[#allocation5 + $0x59]]
        %s521 = sld [smem:[#allocation5 + $0x5a]]
        %s522 = sld [smem:[#allocation5 + $0x5b]]
        %s523 = sld [smem:[#allocation5 + $0x5c]]
        %s524 = sld [smem:[#allocation5 + $0x5d]]
        %s525 = sld [smem:[#allocation5 + $0x5e]]
        %s526 = sld [smem:[#allocation5 + $0x5f]]
        %s527 = sld [smem:[#allocation5 + $0x60]]
        %s528 = sld [smem:[#allocation5 + $0x61]]
        %v529 = vld [vmem:[#allocation2] sm:$0xff]
        %v530 = vld [vmem:[#allocation2 + $0x8] sm:$0xff]
        %v531 = vld [vmem:[#allocation3] sm:$0xff]
        %v532 = vld [vmem:[#allocation3 + $0x8] sm:$0xff]
        %v533 = vstv %s431
        %v534 = vmul.f32 %v533, %v529
        %v535 = vmul.f32 %v533, %v530
        %v536 = vadd.f32 %v534, 0.0
        %v537 = vadd.f32 %v535, 0.0
        %v538 = vstv %s480
        %v539 = vmul.f32 %v538, %v531
        %v540 = vmul.f32 %v538, %v532
        %v541 = vadd.f32 %v539, 0.0
        %v542 = vadd.f32 %v540, 0.0
        %v543 = vstv %s432
        %v544 = vmul.f32 %v543, %v529
        %v545 = vmul.f32 %v543, %v530
        %548 = vrot.lane.b32.xlu0 %v544, 127
        %v549 = vpop.permute.xlu0 %548
        %550 = vrot.lane.b32.xlu0 %v545, 127
        %v551 = vpop.permute.xlu0 %550
        %v554 = vadd.f32 %v536, %v549
        %v555 = vadd.f32 %v537, %v551
        %v556 = vstv %s481
        %v557 = vmul.f32 %v556, %v531
        %v558 = vmul.f32 %v556, %v532
        %561 = vrot.lane.b32.xlu0 %v557, 127
        %v562 = vpop.permute.xlu0 %561
        %563 = vrot.lane.b32.xlu0 %v558, 127
        %v564 = vpop.permute.xlu0 %563
        %v567 = vadd.f32 %v541, %v562
        %v568 = vadd.f32 %v542, %v564
        %v569 = vstv %s433
        %v570 = vmul.f32 %v569, %v529
        %v571 = vmul.f32 %v569, %v530
        %574 = vrot.lane.b32.xlu0 %v570, 126
        %v575 = vpop.permute.xlu0 %574
        %576 = vrot.lane.b32.xlu0 %v571, 126
        %v577 = vpop.permute.xlu0 %576
        %v580 = vadd.f32 %v554, %v575
        %v581 = vadd.f32 %v555, %v577
        %v582 = vstv %s482
        %v583 = vmul.f32 %v582, %v531
        %v584 = vmul.f32 %v582, %v532
        %587 = vrot.lane.b32.xlu0 %v583, 126
        %v588 = vpop.permute.xlu0 %587
        %589 = vrot.lane.b32.xlu0 %v584, 126
        %v590 = vpop.permute.xlu0 %589
        %v593 = vadd.f32 %v567, %v588
        %v594 = vadd.f32 %v568, %v590
        %v595 = vstv %s434
        %v596 = vmul.f32 %v595, %v529
        %v597 = vmul.f32 %v595, %v530
        %600 = vrot.lane.b32.xlu0 %v596, 125
        %v601 = vpop.permute.xlu0 %600
        %602 = vrot.lane.b32.xlu0 %v597, 125
        %v603 = vpop.permute.xlu0 %602
        %v606 = vadd.f32 %v580, %v601
        %v607 = vadd.f32 %v581, %v603
        %v608 = vstv %s483
        %v609 = vmul.f32 %v608, %v531
        %v610 = vmul.f32 %v608, %v532
        %613 = vrot.lane.b32.xlu0 %v609, 125
        %v614 = vpop.permute.xlu0 %613
        %615 = vrot.lane.b32.xlu0 %v610, 125
        %v616 = vpop.permute.xlu0 %615
        %v619 = vadd.f32 %v593, %v614
        %v620 = vadd.f32 %v594, %v616
        %v621 = vstv %s435
        %v622 = vmul.f32 %v621, %v529
        %v623 = vmul.f32 %v621, %v530
        %626 = vrot.lane.b32.xlu0 %v622, 124
        %v627 = vpop.permute.xlu0 %626
        %628 = vrot.lane.b32.xlu0 %v623, 124
        %v629 = vpop.permute.xlu0 %628
        %v632 = vadd.f32 %v606, %v627
        %v633 = vadd.f32 %v607, %v629
        %v634 = vstv %s484
        %v635 = vmul.f32 %v634, %v531
        %v636 = vmul.f32 %v634, %v532
        %639 = vrot.lane.b32.xlu0 %v635, 124
        %v640 = vpop.permute.xlu0 %639
        %641 = vrot.lane.b32.xlu0 %v636, 124
        %v642 = vpop.permute.xlu0 %641
        %v645 = vadd.f32 %v619, %v640
        %v646 = vadd.f32 %v620, %v642
        %v647 = vstv %s436
        %v648 = vmul.f32 %v647, %v529
        %v649 = vmul.f32 %v647, %v530
        %652 = vrot.lane.b32.xlu0 %v648, 123
        %v653 = vpop.permute.xlu0 %652
        %654 = vrot.lane.b32.xlu0 %v649, 123
        %v655 = vpop.permute.xlu0 %654
        %v658 = vadd.f32 %v632, %v653
        %v659 = vadd.f32 %v633, %v655
        %v660 = vstv %s485
        %v661 = vmul.f32 %v660, %v531
        %v662 = vmul.f32 %v660, %v532
        %665 = vrot.lane.b32.xlu0 %v661, 123
        %v666 = vpop.permute.xlu0 %665
        %667 = vrot.lane.b32.xlu0 %v662, 123
        %v668 = vpop.permute.xlu0 %667
        %v671 = vadd.f32 %v645, %v666
        %v672 = vadd.f32 %v646, %v668
        %v673 = vstv %s437
        %v674 = vmul.f32 %v673, %v529
        %v675 = vmul.f32 %v673, %v530
        %678 = vrot.lane.b32.xlu0 %v674, 122
        %v679 = vpop.permute.xlu0 %678
        %680 = vrot.lane.b32.xlu0 %v675, 122
        %v681 = vpop.permute.xlu0 %680
        %v684 = vadd.f32 %v658, %v679
        %v685 = vadd.f32 %v659, %v681
        %v686 = vstv %s486
        %v687 = vmul.f32 %v686, %v531
        %v688 = vmul.f32 %v686, %v532
        %691 = vrot.lane.b32.xlu0 %v687, 122
        %v692 = vpop.permute.xlu0 %691
        %693 = vrot.lane.b32.xlu0 %v688, 122
        %v694 = vpop.permute.xlu0 %693
        %v697 = vadd.f32 %v671, %v692
        %v698 = vadd.f32 %v672, %v694
        %v699 = vld [vmem:[#allocation2 + $0x1] sm:$0xff]
        %v700 = vld [vmem:[#allocation2 + $0x9] sm:$0xff]
        %v701 = vld [vmem:[#allocation3 + $0x1] sm:$0xff]
        %v702 = vld [vmem:[#allocation3 + $0x9] sm:$0xff]
        %v703 = vstv %s438
        %v704 = vmul.f32 %v703, %v699
        %v705 = vmul.f32 %v703, %v700
        %v706 = vadd.f32 %v704, 0.0
        %v707 = vadd.f32 %v705, 0.0
        %v708 = vstv %s487
        %v709 = vmul.f32 %v708, %v701
        %v710 = vmul.f32 %v708, %v702
        %v711 = vadd.f32 %v709, 0.0
        %v712 = vadd.f32 %v710, 0.0
        %v713 = vstv %s439
        %v714 = vmul.f32 %v713, %v699
        %v715 = vmul.f32 %v713, %v700
        %718 = vrot.lane.b32.xlu0 %v714, 127
        %v719 = vpop.permute.xlu0 %718
        %720 = vrot.lane.b32.xlu0 %v715, 127
        %v721 = vpop.permute.xlu0 %720
        %v724 = vadd.f32 %v706, %v719
        %v725 = vadd.f32 %v707, %v721
        %v726 = vstv %s488
        %v727 = vmul.f32 %v726, %v701
        %v728 = vmul.f32 %v726, %v702
        %731 = vrot.lane.b32.xlu0 %v727, 127
        %v732 = vpop.permute.xlu0 %731
        %733 = vrot.lane.b32.xlu0 %v728, 127
        %v734 = vpop.permute.xlu0 %733
        %v737 = vadd.f32 %v711, %v732
        %v738 = vadd.f32 %v712, %v734
        %v739 = vstv %s440
        %v740 = vmul.f32 %v739, %v699
        %v741 = vmul.f32 %v739, %v700
        %744 = vrot.lane.b32.xlu0 %v740, 126
        %v745 = vpop.permute.xlu0 %744
        %746 = vrot.lane.b32.xlu0 %v741, 126
        %v747 = vpop.permute.xlu0 %746
        %v750 = vadd.f32 %v724, %v745
        %v751 = vadd.f32 %v725, %v747
        %v752 = vstv %s489
        %v753 = vmul.f32 %v752, %v701
        %v754 = vmul.f32 %v752, %v702
        %757 = vrot.lane.b32.xlu0 %v753, 126
        %v758 = vpop.permute.xlu0 %757
        %759 = vrot.lane.b32.xlu0 %v754, 126
        %v760 = vpop.permute.xlu0 %759
        %v763 = vadd.f32 %v737, %v758
        %v764 = vadd.f32 %v738, %v760
        %v765 = vstv %s441
        %v766 = vmul.f32 %v765, %v699
        %v767 = vmul.f32 %v765, %v700
        %770 = vrot.lane.b32.xlu0 %v766, 125
        %v771 = vpop.permute.xlu0 %770
        %772 = vrot.lane.b32.xlu0 %v767, 125
        %v773 = vpop.permute.xlu0 %772
        %v776 = vadd.f32 %v750, %v771
        %v777 = vadd.f32 %v751, %v773
        %v778 = vstv %s490
        %v779 = vmul.f32 %v778, %v701
        %v780 = vmul.f32 %v778, %v702
        %783 = vrot.lane.b32.xlu0 %v779, 125
        %v784 = vpop.permute.xlu0 %783
        %785 = vrot.lane.b32.xlu0 %v780, 125
        %v786 = vpop.permute.xlu0 %785
        %v789 = vadd.f32 %v763, %v784
        %v790 = vadd.f32 %v764, %v786
        %v791 = vstv %s442
        %v792 = vmul.f32 %v791, %v699
        %v793 = vmul.f32 %v791, %v700
        %796 = vrot.lane.b32.xlu0 %v792, 124
        %v797 = vpop.permute.xlu0 %796
        %798 = vrot.lane.b32.xlu0 %v793, 124
        %v799 = vpop.permute.xlu0 %798
        %v802 = vadd.f32 %v776, %v797
        %v803 = vadd.f32 %v777, %v799
        %v804 = vstv %s491
        %v805 = vmul.f32 %v804, %v701
        %v806 = vmul.f32 %v804, %v702
        %809 = vrot.lane.b32.xlu0 %v805, 124
        %v810 = vpop.permute.xlu0 %809
        %811 = vrot.lane.b32.xlu0 %v806, 124
        %v812 = vpop.permute.xlu0 %811
        %v815 = vadd.f32 %v789, %v810
        %v816 = vadd.f32 %v790, %v812
        %v817 = vstv %s443
        %v818 = vmul.f32 %v817, %v699
        %v819 = vmul.f32 %v817, %v700
        %822 = vrot.lane.b32.xlu0 %v818, 123
        %v823 = vpop.permute.xlu0 %822
        %824 = vrot.lane.b32.xlu0 %v819, 123
        %v825 = vpop.permute.xlu0 %824
        %v828 = vadd.f32 %v802, %v823
        %v829 = vadd.f32 %v803, %v825
        %v830 = vstv %s492
        %v831 = vmul.f32 %v830, %v701
        %v832 = vmul.f32 %v830, %v702
        %835 = vrot.lane.b32.xlu0 %v831, 123
        %v836 = vpop.permute.xlu0 %835
        %837 = vrot.lane.b32.xlu0 %v832, 123
        %v838 = vpop.permute.xlu0 %837
        %v841 = vadd.f32 %v815, %v836
        %v842 = vadd.f32 %v816, %v838
        %v843 = vstv %s444
        %v844 = vmul.f32 %v843, %v699
        %v845 = vmul.f32 %v843, %v700
        %848 = vrot.lane.b32.xlu0 %v844, 122
        %v849 = vpop.permute.xlu0 %848
        %850 = vrot.lane.b32.xlu0 %v845, 122
        %v851 = vpop.permute.xlu0 %850
        %v854 = vadd.f32 %v828, %v849
        %v855 = vadd.f32 %v829, %v851
        %v856 = vstv %s493
        %v857 = vmul.f32 %v856, %v701
        %v858 = vmul.f32 %v856, %v702
        %861 = vrot.lane.b32.xlu0 %v857, 122
        %v862 = vpop.permute.xlu0 %861
        %863 = vrot.lane.b32.xlu0 %v858, 122
        %v864 = vpop.permute.xlu0 %863
        %v867 = vadd.f32 %v841, %v862
        %v868 = vadd.f32 %v842, %v864
        %v869 = vld [vmem:[#allocation2 + $0x2] sm:$0xff]
        %v870 = vld [vmem:[#allocation2 + $0xa] sm:$0xff]
        %v871 = vld [vmem:[#allocation3 + $0x2] sm:$0xff]
        %v872 = vld [vmem:[#allocation3 + $0xa] sm:$0xff]
        %v873 = vstv %s445
        %v874 = vmul.f32 %v873, %v869
        %v875 = vmul.f32 %v873, %v870
        %v876 = vadd.f32 %v684, %v874
        %v877 = vadd.f32 %v685, %v875
        %v878 = vstv %s494
        %v879 = vmul.f32 %v878, %v871
        %v880 = vmul.f32 %v878, %v872
        %v881 = vadd.f32 %v697, %v879
        %v882 = vadd.f32 %v698, %v880
        %v883 = vstv %s446
        %v884 = vmul.f32 %v883, %v869
        %v885 = vmul.f32 %v883, %v870
        %888 = vrot.lane.b32.xlu0 %v884, 127
        %v889 = vpop.permute.xlu0 %888
        %890 = vrot.lane.b32.xlu0 %v885, 127
        %v891 = vpop.permute.xlu0 %890
        %v894 = vadd.f32 %v876, %v889
        %v895 = vadd.f32 %v877, %v891
        %v896 = vstv %s495
        %v897 = vmul.f32 %v896, %v871
        %v898 = vmul.f32 %v896, %v872
        %901 = vrot.lane.b32.xlu0 %v897, 127
        %v902 = vpop.permute.xlu0 %901
        %903 = vrot.lane.b32.xlu0 %v898, 127
        %v904 = vpop.permute.xlu0 %903
        %v907 = vadd.f32 %v881, %v902
        %v908 = vadd.f32 %v882, %v904
        %v909 = vstv %s447
        %v910 = vmul.f32 %v909, %v869
        %v911 = vmul.f32 %v909, %v870
        %914 = vrot.lane.b32.xlu0 %v910, 126
        %v915 = vpop.permute.xlu0 %914
        %916 = vrot.lane.b32.xlu0 %v911, 126
        %v917 = vpop.permute.xlu0 %916
        %v920 = vadd.f32 %v894, %v915
        %v921 = vadd.f32 %v895, %v917
        %v922 = vstv %s496
        %v923 = vmul.f32 %v922, %v871
        %v924 = vmul.f32 %v922, %v872
        %927 = vrot.lane.b32.xlu0 %v923, 126
        %v928 = vpop.permute.xlu0 %927
        %929 = vrot.lane.b32.xlu0 %v924, 126
        %v930 = vpop.permute.xlu0 %929
        %v933 = vadd.f32 %v907, %v928
        %v934 = vadd.f32 %v908, %v930
        %v935 = vstv %s448
        %v936 = vmul.f32 %v935, %v869
        %v937 = vmul.f32 %v935, %v870
        %940 = vrot.lane.b32.xlu0 %v936, 125
        %v941 = vpop.permute.xlu0 %940
        %942 = vrot.lane.b32.xlu0 %v937, 125
        %v943 = vpop.permute.xlu0 %942
        %v946 = vadd.f32 %v920, %v941
        %v947 = vadd.f32 %v921, %v943
        %v948 = vstv %s497
        %v949 = vmul.f32 %v948, %v871
        %v950 = vmul.f32 %v948, %v872
        %953 = vrot.lane.b32.xlu0 %v949, 125
        %v954 = vpop.permute.xlu0 %953
        %955 = vrot.lane.b32.xlu0 %v950, 125
        %v956 = vpop.permute.xlu0 %955
        %v959 = vadd.f32 %v933, %v954
        %v960 = vadd.f32 %v934, %v956
        %v961 = vstv %s449
        %v962 = vmul.f32 %v961, %v869
        %v963 = vmul.f32 %v961, %v870
        %966 = vrot.lane.b32.xlu0 %v962, 124
        %v967 = vpop.permute.xlu0 %966
        %968 = vrot.lane.b32.xlu0 %v963, 124
        %v969 = vpop.permute.xlu0 %968
        %v972 = vadd.f32 %v946, %v967
        %v973 = vadd.f32 %v947, %v969
        %v974 = vstv %s498
        %v975 = vmul.f32 %v974, %v871
        %v976 = vmul.f32 %v974, %v872
        %979 = vrot.lane.b32.xlu0 %v975, 124
        %v980 = vpop.permute.xlu0 %979
        %981 = vrot.lane.b32.xlu0 %v976, 124
        %v982 = vpop.permute.xlu0 %981
        %v985 = vadd.f32 %v959, %v980
        %v986 = vadd.f32 %v960, %v982
        %v987 = vstv %s450
        %v988 = vmul.f32 %v987, %v869
        %v989 = vmul.f32 %v987, %v870
        %992 = vrot.lane.b32.xlu0 %v988, 123
        %v993 = vpop.permute.xlu0 %992
        %994 = vrot.lane.b32.xlu0 %v989, 123
        %v995 = vpop.permute.xlu0 %994
        %v998 = vadd.f32 %v972, %v993
        %v999 = vadd.f32 %v973, %v995
        %v1000 = vstv %s499
        %v1001 = vmul.f32 %v1000, %v871
        %v1002 = vmul.f32 %v1000, %v872
        %1005 = vrot.lane.b32.xlu0 %v1001, 123
        %v1006 = vpop.permute.xlu0 %1005
        %1007 = vrot.lane.b32.xlu0 %v1002, 123
        %v1008 = vpop.permute.xlu0 %1007
        %v1011 = vadd.f32 %v985, %v1006
        %v1012 = vadd.f32 %v986, %v1008
        %v1013 = vstv %s451
        %v1014 = vmul.f32 %v1013, %v869
        %v1015 = vmul.f32 %v1013, %v870
        %1018 = vrot.lane.b32.xlu0 %v1014, 122
        %v1019 = vpop.permute.xlu0 %1018
        %1020 = vrot.lane.b32.xlu0 %v1015, 122
        %v1021 = vpop.permute.xlu0 %1020
        %v1024 = vadd.f32 %v998, %v1019
        %v1025 = vadd.f32 %v999, %v1021
        %v1026 = vstv %s500
        %v1027 = vmul.f32 %v1026, %v871
        %v1028 = vmul.f32 %v1026, %v872
        %1031 = vrot.lane.b32.xlu0 %v1027, 122
        %v1032 = vpop.permute.xlu0 %1031
        %1033 = vrot.lane.b32.xlu0 %v1028, 122
        %v1034 = vpop.permute.xlu0 %1033
        %v1037 = vadd.f32 %v1011, %v1032
        %v1038 = vadd.f32 %v1012, %v1034
        %v1039 = vld [vmem:[#allocation2 + $0x3] sm:$0xff]
        %v1040 = vld [vmem:[#allocation2 + $0xb] sm:$0xff]
        %v1041 = vld [vmem:[#allocation3 + $0x3] sm:$0xff]
        %v1042 = vld [vmem:[#allocation3 + $0xb] sm:$0xff]
        %v1043 = vstv %s452
        %v1044 = vmul.f32 %v1043, %v1039
        %v1045 = vmul.f32 %v1043, %v1040
        %v1046 = vadd.f32 %v854, %v1044
        %v1047 = vadd.f32 %v855, %v1045
        %v1048 = vstv %s501
        %v1049 = vmul.f32 %v1048, %v1041
        %v1050 = vmul.f32 %v1048, %v1042
        %v1051 = vadd.f32 %v867, %v1049
        %v1052 = vadd.f32 %v868, %v1050
        %v1053 = vstv %s453
        %v1054 = vmul.f32 %v1053, %v1039
        %v1055 = vmul.f32 %v1053, %v1040
        %1058 = vrot.lane.b32.xlu0 %v1054, 127
        %v1059 = vpop.permute.xlu0 %1058
        %1060 = vrot.lane.b32.xlu0 %v1055, 127
        %v1061 = vpop.permute.xlu0 %1060
        %v1064 = vadd.f32 %v1046, %v1059
        %v1065 = vadd.f32 %v1047, %v1061
        %v1066 = vstv %s502
        %v1067 = vmul.f32 %v1066, %v1041
        %v1068 = vmul.f32 %v1066, %v1042
        %1071 = vrot.lane.b32.xlu0 %v1067, 127
        %v1072 = vpop.permute.xlu0 %1071
        %1073 = vrot.lane.b32.xlu0 %v1068, 127
        %v1074 = vpop.permute.xlu0 %1073
        %v1077 = vadd.f32 %v1051, %v1072
        %v1078 = vadd.f32 %v1052, %v1074
        %v1079 = vstv %s454
        %v1080 = vmul.f32 %v1079, %v1039
        %v1081 = vmul.f32 %v1079, %v1040
        %1084 = vrot.lane.b32.xlu0 %v1080, 126
        %v1085 = vpop.permute.xlu0 %1084
        %1086 = vrot.lane.b32.xlu0 %v1081, 126
        %v1087 = vpop.permute.xlu0 %1086
        %v1090 = vadd.f32 %v1064, %v1085
        %v1091 = vadd.f32 %v1065, %v1087
        %v1092 = vstv %s503
        %v1093 = vmul.f32 %v1092, %v1041
        %v1094 = vmul.f32 %v1092, %v1042
        %1097 = vrot.lane.b32.xlu0 %v1093, 126
        %v1098 = vpop.permute.xlu0 %1097
        %1099 = vrot.lane.b32.xlu0 %v1094, 126
        %v1100 = vpop.permute.xlu0 %1099
        %v1103 = vadd.f32 %v1077, %v1098
        %v1104 = vadd.f32 %v1078, %v1100
        %v1105 = vstv %s455
        %v1106 = vmul.f32 %v1105, %v1039
        %v1107 = vmul.f32 %v1105, %v1040
        %1110 = vrot.lane.b32.xlu0 %v1106, 125
        %v1111 = vpop.permute.xlu0 %1110
        %1112 = vrot.lane.b32.xlu0 %v1107, 125
        %v1113 = vpop.permute.xlu0 %1112
        %v1116 = vadd.f32 %v1090, %v1111
        %v1117 = vadd.f32 %v1091, %v1113
        %v1118 = vstv %s504
        %v1119 = vmul.f32 %v1118, %v1041
        %v1120 = vmul.f32 %v1118, %v1042
        %1123 = vrot.lane.b32.xlu0 %v1119, 125
        %v1124 = vpop.permute.xlu0 %1123
        %1125 = vrot.lane.b32.xlu0 %v1120, 125
        %v1126 = vpop.permute.xlu0 %1125
        %v1129 = vadd.f32 %v1103, %v1124
        %v1130 = vadd.f32 %v1104, %v1126
        %v1131 = vstv %s456
        %v1132 = vmul.f32 %v1131, %v1039
        %v1133 = vmul.f32 %v1131, %v1040
        %1136 = vrot.lane.b32.xlu0 %v1132, 124
        %v1137 = vpop.permute.xlu0 %1136
        %1138 = vrot.lane.b32.xlu0 %v1133, 124
        %v1139 = vpop.permute.xlu0 %1138
        %v1142 = vadd.f32 %v1116, %v1137
        %v1143 = vadd.f32 %v1117, %v1139
        %v1144 = vstv %s505
        %v1145 = vmul.f32 %v1144, %v1041
        %v1146 = vmul.f32 %v1144, %v1042
        %1149 = vrot.lane.b32.xlu0 %v1145, 124
        %v1150 = vpop.permute.xlu0 %1149
        %1151 = vrot.lane.b32.xlu0 %v1146, 124
        %v1152 = vpop.permute.xlu0 %1151
        %v1155 = vadd.f32 %v1129, %v1150
        %v1156 = vadd.f32 %v1130, %v1152
        %v1157 = vstv %s457
        %v1158 = vmul.f32 %v1157, %v1039
        %v1159 = vmul.f32 %v1157, %v1040
        %1162 = vrot.lane.b32.xlu0 %v1158, 123
        %v1163 = vpop.permute.xlu0 %1162
        %1164 = vrot.lane.b32.xlu0 %v1159, 123
        %v1165 = vpop.permute.xlu0 %1164
        %v1168 = vadd.f32 %v1142, %v1163
        %v1169 = vadd.f32 %v1143, %v1165
        %v1170 = vstv %s506
        %v1171 = vmul.f32 %v1170, %v1041
        %v1172 = vmul.f32 %v1170, %v1042
        %1175 = vrot.lane.b32.xlu0 %v1171, 123
        %v1176 = vpop.permute.xlu0 %1175
        %1177 = vrot.lane.b32.xlu0 %v1172, 123
        %v1178 = vpop.permute.xlu0 %1177
        %v1181 = vadd.f32 %v1155, %v1176
        %v1182 = vadd.f32 %v1156, %v1178
        %v1183 = vstv %s458
        %v1184 = vmul.f32 %v1183, %v1039
        %v1185 = vmul.f32 %v1183, %v1040
        %1188 = vrot.lane.b32.xlu0 %v1184, 122
        %v1189 = vpop.permute.xlu0 %1188
        %1190 = vrot.lane.b32.xlu0 %v1185, 122
        %v1191 = vpop.permute.xlu0 %1190
        %v1194 = vadd.f32 %v1168, %v1189
        %v1195 = vadd.f32 %v1169, %v1191
        %v1196 = vstv %s507
        %v1197 = vmul.f32 %v1196, %v1041
        %v1198 = vmul.f32 %v1196, %v1042
        %1201 = vrot.lane.b32.xlu0 %v1197, 122
        %v1202 = vpop.permute.xlu0 %1201
        %1203 = vrot.lane.b32.xlu0 %v1198, 122
        %v1204 = vpop.permute.xlu0 %1203
        %v1207 = vadd.f32 %v1181, %v1202
        %v1208 = vadd.f32 %v1182, %v1204
        %v1209 = vld [vmem:[#allocation2 + $0x4] sm:$0xff]
        %v1210 = vld [vmem:[#allocation2 + $0xc] sm:$0xff]
        %v1211 = vld [vmem:[#allocation3 + $0x4] sm:$0xff]
        %v1212 = vld [vmem:[#allocation3 + $0xc] sm:$0xff]
        %v1213 = vstv %s459
        %v1214 = vmul.f32 %v1213, %v1209
        %v1215 = vmul.f32 %v1213, %v1210
        %v1216 = vadd.f32 %v1024, %v1214
        %v1217 = vadd.f32 %v1025, %v1215
        %v1218 = vstv %s508
        %v1219 = vmul.f32 %v1218, %v1211
        %v1220 = vmul.f32 %v1218, %v1212
        %v1221 = vadd.f32 %v1037, %v1219
        %v1222 = vadd.f32 %v1038, %v1220
        %v1223 = vstv %s460
        %v1224 = vmul.f32 %v1223, %v1209
        %v1225 = vmul.f32 %v1223, %v1210
        %1228 = vrot.lane.b32.xlu0 %v1224, 127
        %v1229 = vpop.permute.xlu0 %1228
        %1230 = vrot.lane.b32.xlu0 %v1225, 127
        %v1231 = vpop.permute.xlu0 %1230
        %v1234 = vadd.f32 %v1216, %v1229
        %v1235 = vadd.f32 %v1217, %v1231
        %v1236 = vstv %s509
        %v1237 = vmul.f32 %v1236, %v1211
        %v1238 = vmul.f32 %v1236, %v1212
        %1241 = vrot.lane.b32.xlu0 %v1237, 127
        %v1242 = vpop.permute.xlu0 %1241
        %1243 = vrot.lane.b32.xlu0 %v1238, 127
        %v1244 = vpop.permute.xlu0 %1243
        %v1247 = vadd.f32 %v1221, %v1242
        %v1248 = vadd.f32 %v1222, %v1244
        %v1249 = vstv %s461
        %v1250 = vmul.f32 %v1249, %v1209
        %v1251 = vmul.f32 %v1249, %v1210
        %1254 = vrot.lane.b32.xlu0 %v1250, 126
        %v1255 = vpop.permute.xlu0 %1254
        %1256 = vrot.lane.b32.xlu0 %v1251, 126
        %v1257 = vpop.permute.xlu0 %1256
        %v1260 = vadd.f32 %v1234, %v1255
        %v1261 = vadd.f32 %v1235, %v1257
        %v1262 = vstv %s510
        %v1263 = vmul.f32 %v1262, %v1211
        %v1264 = vmul.f32 %v1262, %v1212
        %1267 = vrot.lane.b32.xlu0 %v1263, 126
        %v1268 = vpop.permute.xlu0 %1267
        %1269 = vrot.lane.b32.xlu0 %v1264, 126
        %v1270 = vpop.permute.xlu0 %1269
        %v1273 = vadd.f32 %v1247, %v1268
        %v1274 = vadd.f32 %v1248, %v1270
        %v1275 = vstv %s462
        %v1276 = vmul.f32 %v1275, %v1209
        %v1277 = vmul.f32 %v1275, %v1210
        %1280 = vrot.lane.b32.xlu0 %v1276, 125
        %v1281 = vpop.permute.xlu0 %1280
        %1282 = vrot.lane.b32.xlu0 %v1277, 125
        %v1283 = vpop.permute.xlu0 %1282
        %v1286 = vadd.f32 %v1260, %v1281
        %v1287 = vadd.f32 %v1261, %v1283
        %v1288 = vstv %s511
        %v1289 = vmul.f32 %v1288, %v1211
        %v1290 = vmul.f32 %v1288, %v1212
        %1293 = vrot.lane.b32.xlu0 %v1289, 125
        %v1294 = vpop.permute.xlu0 %1293
        %1295 = vrot.lane.b32.xlu0 %v1290, 125
        %v1296 = vpop.permute.xlu0 %1295
        %v1299 = vadd.f32 %v1273, %v1294
        %v1300 = vadd.f32 %v1274, %v1296
        %v1301 = vstv %s463
        %v1302 = vmul.f32 %v1301, %v1209
        %v1303 = vmul.f32 %v1301, %v1210
        %1306 = vrot.lane.b32.xlu0 %v1302, 124
        %v1307 = vpop.permute.xlu0 %1306
        %1308 = vrot.lane.b32.xlu0 %v1303, 124
        %v1309 = vpop.permute.xlu0 %1308
        %v1312 = vadd.f32 %v1286, %v1307
        %v1313 = vadd.f32 %v1287, %v1309
        %v1314 = vstv %s512
        %v1315 = vmul.f32 %v1314, %v1211
        %v1316 = vmul.f32 %v1314, %v1212
        %1319 = vrot.lane.b32.xlu0 %v1315, 124
        %v1320 = vpop.permute.xlu0 %1319
        %1321 = vrot.lane.b32.xlu0 %v1316, 124
        %v1322 = vpop.permute.xlu0 %1321
        %v1325 = vadd.f32 %v1299, %v1320
        %v1326 = vadd.f32 %v1300, %v1322
        %v1327 = vstv %s464
        %v1328 = vmul.f32 %v1327, %v1209
        %v1329 = vmul.f32 %v1327, %v1210
        %1332 = vrot.lane.b32.xlu0 %v1328, 123
        %v1333 = vpop.permute.xlu0 %1332
        %1334 = vrot.lane.b32.xlu0 %v1329, 123
        %v1335 = vpop.permute.xlu0 %1334
        %v1338 = vadd.f32 %v1312, %v1333
        %v1339 = vadd.f32 %v1313, %v1335
        %v1340 = vstv %s513
        %v1341 = vmul.f32 %v1340, %v1211
        %v1342 = vmul.f32 %v1340, %v1212
        %1345 = vrot.lane.b32.xlu0 %v1341, 123
        %v1346 = vpop.permute.xlu0 %1345
        %1347 = vrot.lane.b32.xlu0 %v1342, 123
        %v1348 = vpop.permute.xlu0 %1347
        %v1351 = vadd.f32 %v1325, %v1346
        %v1352 = vadd.f32 %v1326, %v1348
        %v1353 = vstv %s465
        %v1354 = vmul.f32 %v1353, %v1209
        %v1355 = vmul.f32 %v1353, %v1210
        %1358 = vrot.lane.b32.xlu0 %v1354, 122
        %v1359 = vpop.permute.xlu0 %1358
        %1360 = vrot.lane.b32.xlu0 %v1355, 122
        %v1361 = vpop.permute.xlu0 %1360
        %v1364 = vadd.f32 %v1338, %v1359
        %v1365 = vadd.f32 %v1339, %v1361
        %v1366 = vstv %s514
        %v1367 = vmul.f32 %v1366, %v1211
        %v1368 = vmul.f32 %v1366, %v1212
        %1371 = vrot.lane.b32.xlu0 %v1367, 122
        %v1372 = vpop.permute.xlu0 %1371
        %1373 = vrot.lane.b32.xlu0 %v1368, 122
        %v1374 = vpop.permute.xlu0 %1373
        %v1377 = vadd.f32 %v1351, %v1372
        %v1378 = vadd.f32 %v1352, %v1374
        %v1379 = vld [vmem:[#allocation2 + $0x5] sm:$0xff]
        %v1380 = vld [vmem:[#allocation2 + $0xd] sm:$0xff]
        %v1381 = vld [vmem:[#allocation3 + $0x5] sm:$0xff]
        %v1382 = vld [vmem:[#allocation3 + $0xd] sm:$0xff]
        %v1383 = vstv %s466
        %v1384 = vmul.f32 %v1383, %v1379
        %v1385 = vmul.f32 %v1383, %v1380
        %v1386 = vadd.f32 %v1194, %v1384
        %v1387 = vadd.f32 %v1195, %v1385
        %v1388 = vstv %s515
        %v1389 = vmul.f32 %v1388, %v1381
        %v1390 = vmul.f32 %v1388, %v1382
        %v1391 = vadd.f32 %v1207, %v1389
        %v1392 = vadd.f32 %v1208, %v1390
        %v1393 = vstv %s467
        %v1394 = vmul.f32 %v1393, %v1379
        %v1395 = vmul.f32 %v1393, %v1380
        %1398 = vrot.lane.b32.xlu0 %v1394, 127
        %v1399 = vpop.permute.xlu0 %1398
        %1400 = vrot.lane.b32.xlu0 %v1395, 127
        %v1401 = vpop.permute.xlu0 %1400
        %v1404 = vadd.f32 %v1386, %v1399
        %v1405 = vadd.f32 %v1387, %v1401
        %v1406 = vstv %s516
        %v1407 = vmul.f32 %v1406, %v1381
        %v1408 = vmul.f32 %v1406, %v1382
        %1411 = vrot.lane.b32.xlu0 %v1407, 127
        %v1412 = vpop.permute.xlu0 %1411
        %1413 = vrot.lane.b32.xlu0 %v1408, 127
        %v1414 = vpop.permute.xlu0 %1413
        %v1417 = vadd.f32 %v1391, %v1412
        %v1418 = vadd.f32 %v1392, %v1414
        %v1419 = vstv %s468
        %v1420 = vmul.f32 %v1419, %v1379
        %v1421 = vmul.f32 %v1419, %v1380
        %1424 = vrot.lane.b32.xlu0 %v1420, 126
        %v1425 = vpop.permute.xlu0 %1424
        %1426 = vrot.lane.b32.xlu0 %v1421, 126
        %v1427 = vpop.permute.xlu0 %1426
        %v1430 = vadd.f32 %v1404, %v1425
        %v1431 = vadd.f32 %v1405, %v1427
        %v1432 = vstv %s517
        %v1433 = vmul.f32 %v1432, %v1381
        %v1434 = vmul.f32 %v1432, %v1382
        %1437 = vrot.lane.b32.xlu0 %v1433, 126
        %v1438 = vpop.permute.xlu0 %1437
        %1439 = vrot.lane.b32.xlu0 %v1434, 126
        %v1440 = vpop.permute.xlu0 %1439
        %v1443 = vadd.f32 %v1417, %v1438
        %v1444 = vadd.f32 %v1418, %v1440
        %v1445 = vstv %s469
        %v1446 = vmul.f32 %v1445, %v1379
        %v1447 = vmul.f32 %v1445, %v1380
        %1450 = vrot.lane.b32.xlu0 %v1446, 125
        %v1451 = vpop.permute.xlu0 %1450
        %1452 = vrot.lane.b32.xlu0 %v1447, 125
        %v1453 = vpop.permute.xlu0 %1452
        %v1456 = vadd.f32 %v1430, %v1451
        %v1457 = vadd.f32 %v1431, %v1453
        %v1458 = vstv %s518
        %v1459 = vmul.f32 %v1458, %v1381
        %v1460 = vmul.f32 %v1458, %v1382
        %1463 = vrot.lane.b32.xlu0 %v1459, 125
        %v1464 = vpop.permute.xlu0 %1463
        %1465 = vrot.lane.b32.xlu0 %v1460, 125
        %v1466 = vpop.permute.xlu0 %1465
        %v1469 = vadd.f32 %v1443, %v1464
        %v1470 = vadd.f32 %v1444, %v1466
        %v1471 = vstv %s470
        %v1472 = vmul.f32 %v1471, %v1379
        %v1473 = vmul.f32 %v1471, %v1380
        %1476 = vrot.lane.b32.xlu0 %v1472, 124
        %v1477 = vpop.permute.xlu0 %1476
        %1478 = vrot.lane.b32.xlu0 %v1473, 124
        %v1479 = vpop.permute.xlu0 %1478
        %v1482 = vadd.f32 %v1456, %v1477
        %v1483 = vadd.f32 %v1457, %v1479
        %v1484 = vstv %s519
        %v1485 = vmul.f32 %v1484, %v1381
        %v1486 = vmul.f32 %v1484, %v1382
        %1489 = vrot.lane.b32.xlu0 %v1485, 124
        %v1490 = vpop.permute.xlu0 %1489
        %1491 = vrot.lane.b32.xlu0 %v1486, 124
        %v1492 = vpop.permute.xlu0 %1491
        %v1495 = vadd.f32 %v1469, %v1490
        %v1496 = vadd.f32 %v1470, %v1492
        %v1497 = vstv %s471
        %v1498 = vmul.f32 %v1497, %v1379
        %v1499 = vmul.f32 %v1497, %v1380
        %1502 = vrot.lane.b32.xlu0 %v1498, 123
        %v1503 = vpop.permute.xlu0 %1502
        %1504 = vrot.lane.b32.xlu0 %v1499, 123
        %v1505 = vpop.permute.xlu0 %1504
        %v1508 = vadd.f32 %v1482, %v1503
        %v1509 = vadd.f32 %v1483, %v1505
        %v1510 = vstv %s520
        %v1511 = vmul.f32 %v1510, %v1381
        %v1512 = vmul.f32 %v1510, %v1382
        %1515 = vrot.lane.b32.xlu0 %v1511, 123
        %v1516 = vpop.permute.xlu0 %1515
        %1517 = vrot.lane.b32.xlu0 %v1512, 123
        %v1518 = vpop.permute.xlu0 %1517
        %v1521 = vadd.f32 %v1495, %v1516
        %v1522 = vadd.f32 %v1496, %v1518
        %v1523 = vstv %s472
        %v1524 = vmul.f32 %v1523, %v1379
        %v1525 = vmul.f32 %v1523, %v1380
        %1528 = vrot.lane.b32.xlu0 %v1524, 122
        %v1529 = vpop.permute.xlu0 %1528
        %1530 = vrot.lane.b32.xlu0 %v1525, 122
        %v1531 = vpop.permute.xlu0 %1530
        %v1534 = vadd.f32 %v1508, %v1529
        %v1535 = vadd.f32 %v1509, %v1531
        %v1536 = vstv %s521
        %v1537 = vmul.f32 %v1536, %v1381
        %v1538 = vmul.f32 %v1536, %v1382
        %1541 = vrot.lane.b32.xlu0 %v1537, 122
        %v1542 = vpop.permute.xlu0 %1541
        %1543 = vrot.lane.b32.xlu0 %v1538, 122
        %v1544 = vpop.permute.xlu0 %1543
        %v1547 = vadd.f32 %v1521, %v1542
        %v1548 = vadd.f32 %v1522, %v1544
        %v1549 = vld [vmem:[#allocation2 + $0x6] sm:$0xff]
        %v1550 = vld [vmem:[#allocation2 + $0xe] sm:$0xff]
        %v1551 = vld [vmem:[#allocation3 + $0x6] sm:$0xff]
        %v1552 = vld [vmem:[#allocation3 + $0xe] sm:$0xff]
        %v1553 = vstv %s473
        %v1554 = vmul.f32 %v1553, %v1549
        %v1555 = vmul.f32 %v1553, %v1550
        %v1556 = vadd.f32 %v1364, %v1554
        %v1557 = vadd.f32 %v1365, %v1555
        %v1558 = vstv %s522
        %v1559 = vmul.f32 %v1558, %v1551
        %v1560 = vmul.f32 %v1558, %v1552
        %v1561 = vadd.f32 %v1377, %v1559
        %v1562 = vadd.f32 %v1378, %v1560
        %v1563 = vstv %s474
        %v1564 = vmul.f32 %v1563, %v1549
        %v1565 = vmul.f32 %v1563, %v1550
        %1568 = vrot.lane.b32.xlu0 %v1564, 127
        %v1569 = vpop.permute.xlu0 %1568
        %1570 = vrot.lane.b32.xlu0 %v1565, 127
        %v1571 = vpop.permute.xlu0 %1570
        %v1574 = vadd.f32 %v1556, %v1569
        %v1575 = vadd.f32 %v1557, %v1571
        %v1576 = vstv %s523
        %v1577 = vmul.f32 %v1576, %v1551
        %v1578 = vmul.f32 %v1576, %v1552
        %1581 = vrot.lane.b32.xlu0 %v1577, 127
        %v1582 = vpop.permute.xlu0 %1581
        %1583 = vrot.lane.b32.xlu0 %v1578, 127
        %v1584 = vpop.permute.xlu0 %1583
        %v1587 = vadd.f32 %v1561, %v1582
        %v1588 = vadd.f32 %v1562, %v1584
        %v1589 = vstv %s475
        %v1590 = vmul.f32 %v1589, %v1549
        %v1591 = vmul.f32 %v1589, %v1550
        %1594 = vrot.lane.b32.xlu0 %v1590, 126
        %v1595 = vpop.permute.xlu0 %1594
        %1596 = vrot.lane.b32.xlu0 %v1591, 126
        %v1597 = vpop.permute.xlu0 %1596
        %v1600 = vadd.f32 %v1574, %v1595
        %v1601 = vadd.f32 %v1575, %v1597
        %v1602 = vstv %s524
        %v1603 = vmul.f32 %v1602, %v1551
        %v1604 = vmul.f32 %v1602, %v1552
        %1607 = vrot.lane.b32.xlu0 %v1603, 126
        %v1608 = vpop.permute.xlu0 %1607
        %1609 = vrot.lane.b32.xlu0 %v1604, 126
        %v1610 = vpop.permute.xlu0 %1609
        %v1613 = vadd.f32 %v1587, %v1608
        %v1614 = vadd.f32 %v1588, %v1610
        %v1615 = vstv %s476
        %v1616 = vmul.f32 %v1615, %v1549
        %v1617 = vmul.f32 %v1615, %v1550
        %1620 = vrot.lane.b32.xlu0 %v1616, 125
        %v1621 = vpop.permute.xlu0 %1620
        %1622 = vrot.lane.b32.xlu0 %v1617, 125
        %v1623 = vpop.permute.xlu0 %1622
        %v1626 = vadd.f32 %v1600, %v1621
        %v1627 = vadd.f32 %v1601, %v1623
        %v1628 = vstv %s525
        %v1629 = vmul.f32 %v1628, %v1551
        %v1630 = vmul.f32 %v1628, %v1552
        %1633 = vrot.lane.b32.xlu0 %v1629, 125
        %v1634 = vpop.permute.xlu0 %1633
        %1635 = vrot.lane.b32.xlu0 %v1630, 125
        %v1636 = vpop.permute.xlu0 %1635
        %v1639 = vadd.f32 %v1613, %v1634
        %v1640 = vadd.f32 %v1614, %v1636
        %v1641 = vstv %s477
        %v1642 = vmul.f32 %v1641, %v1549
        %v1643 = vmul.f32 %v1641, %v1550
        %1646 = vrot.lane.b32.xlu0 %v1642, 124
        %v1647 = vpop.permute.xlu0 %1646
        %1648 = vrot.lane.b32.xlu0 %v1643, 124
        %v1649 = vpop.permute.xlu0 %1648
        %v1652 = vadd.f32 %v1626, %v1647
        %v1653 = vadd.f32 %v1627, %v1649
        %v1654 = vstv %s526
        %v1655 = vmul.f32 %v1654, %v1551
        %v1656 = vmul.f32 %v1654, %v1552
        %1659 = vrot.lane.b32.xlu0 %v1655, 124
        %v1660 = vpop.permute.xlu0 %1659
        %1661 = vrot.lane.b32.xlu0 %v1656, 124
        %v1662 = vpop.permute.xlu0 %1661
        %v1665 = vadd.f32 %v1639, %v1660
        %v1666 = vadd.f32 %v1640, %v1662
        %v1667 = vstv %s478
        %v1668 = vmul.f32 %v1667, %v1549
        %v1669 = vmul.f32 %v1667, %v1550
        %1672 = vrot.lane.b32.xlu0 %v1668, 123
        %v1673 = vpop.permute.xlu0 %1672
        %1674 = vrot.lane.b32.xlu0 %v1669, 123
        %v1675 = vpop.permute.xlu0 %1674
        %v1678 = vadd.f32 %v1652, %v1673
        %v1679 = vadd.f32 %v1653, %v1675
        %v1680 = vstv %s527
        %v1681 = vmul.f32 %v1680, %v1551
        %v1682 = vmul.f32 %v1680, %v1552
        %1685 = vrot.lane.b32.xlu0 %v1681, 123
        %v1686 = vpop.permute.xlu0 %1685
        %1687 = vrot.lane.b32.xlu0 %v1682, 123
        %v1688 = vpop.permute.xlu0 %1687
        %v1691 = vadd.f32 %v1665, %v1686
        %v1692 = vadd.f32 %v1666, %v1688
        %v1693 = vstv %s479
        %v1694 = vmul.f32 %v1693, %v1549
        %v1695 = vmul.f32 %v1693, %v1550
        %1698 = vrot.lane.b32.xlu0 %v1694, 122
        %v1699 = vpop.permute.xlu0 %1698
        %1700 = vrot.lane.b32.xlu0 %v1695, 122
        %v1701 = vpop.permute.xlu0 %1700
        %v1704 = vadd.f32 %v1678, %v1699
        %v1705 = vadd.f32 %v1679, %v1701
        %v1706 = vstv %s528
        %v1707 = vmul.f32 %v1706, %v1551
        %v1708 = vmul.f32 %v1706, %v1552
        %1711 = vrot.lane.b32.xlu0 %v1707, 122
        %v1712 = vpop.permute.xlu0 %1711
        %1713 = vrot.lane.b32.xlu0 %v1708, 122
        %v1714 = vpop.permute.xlu0 %1713
        %v1717 = vadd.f32 %v1691, %v1712
        %v1718 = vadd.f32 %v1692, %v1714
        %v1719 = vadd.f32 %v1704, %v1717
        %v1720 = vadd.f32 %v1705, %v1718
        %v1721 = vadd.f32 %v1534, %v1547
        %v1722 = vadd.f32 %v1535, %v1548
        %v1723 = vadd.f32 %v1719, %v1721
        %v1724 = vadd.f32 %v1720, %v1722
        %s1725 = sld [smem:[#allocation6]]
        %v1726 = vstv %s1725
        %v1727 = vadd.f32 %v1723, %v1726
        %v1728 = vadd.f32 %v1724, %v1726
        %v1729 = vxor.u32 %v1727, 2147483648
        %v1730 = vxor.u32 %v1728, 2147483648
        %v1731 = vmul.f32 %v1729, 1.442695
        %v1732 = vpow.pop %v1731
        %v1733 = vmul.f32 %v1730, 1.442695
        %v1734 = vpow.pop %v1733
        %v1735 = vadd.f32 %v1732, 1.0
        %v1736 = vadd.f32 %v1734, 1.0
        %v1737 = vrcp.pop %v1735
        %v1738 = vmul.f32 1.0, %v1737
        %v1739 = vrcp.pop %v1736
        %v1740 = vmul.f32 1.0, %v1739
        %v1741 = vcombine.high %v1738, 0.0
        %v1743 = vunpack.c.l.s4 1983009808
        %v1744 = vunpack.c.0.s8 %v1743
        %v1745 = vlaneseq
        %v1746 = vshrl.u32 %v1745, 7
        %v1747 = vsub.s32 %v1744, %v1746
        %v1748 = vrot.slane %v1738, %v1747
        %v1750 = vunpack.c.l.s4 1983009808
        %v1751 = vunpack.c.0.s8 %v1750
        %v1752 = vlaneseq
        %v1753 = vshrl.u32 %v1752, 7
        %v1754 = vsub.s32 %v1751, %v1753
        %v1755 = vrot.slane %v1741, %v1754
        %v1756 = vcombine.high %v1748, 0.0
        %v1758 = vunpack.c.l.s4 1934713408
        %v1759 = vunpack.c.0.s8 %v1758
        %v1760 = vlaneseq
        %v1761 = vshrl.u32 %v1760, 7
        %v1762 = vsub.s32 %v1759, %v1761
        %v1763 = vrot.slane %v1748, %v1762
        %v1765 = vunpack.c.l.s4 1934713408
        %v1766 = vunpack.c.0.s8 %v1765
        %v1767 = vlaneseq
        %v1768 = vshrl.u32 %v1767, 7
        %v1769 = vsub.s32 %v1766, %v1768
        %v1770 = vrot.slane %v1756, %v1769
        %v1771 = vcombine.high %v1755, 0.0
        %v1773 = vunpack.c.l.s4 1934713408
        %v1774 = vunpack.c.0.s8 %v1773
        %v1775 = vlaneseq
        %v1776 = vshrl.u32 %v1775, 7
        %v1777 = vsub.s32 %v1774, %v1776
        %v1778 = vrot.slane %v1755, %v1777
        %v1780 = vunpack.c.l.s4 1934713408
        %v1781 = vunpack.c.0.s8 %v1780
        %v1782 = vlaneseq
        %v1783 = vshrl.u32 %v1782, 7
        %v1784 = vsub.s32 %v1781, %v1783
        %v1785 = vrot.slane %v1771, %v1784
        %v1786 = vcombine.high %v1763, 0.0
        %v1787 = vcombine.high %v1770, 0.0
        %v1788 = vcombine.high %v1778, 0.0
        %v1789 = vcombine.high %v1785, 0.0
        %v1790 = vcombine.high %v1740, 0.0
        %v1792 = vunpack.c.l.s4 1983009808
        %v1793 = vunpack.c.0.s8 %v1792
        %v1794 = vlaneseq
        %v1795 = vshrl.u32 %v1794, 7
        %v1796 = vsub.s32 %v1793, %v1795
        %v1797 = vrot.slane %v1740, %v1796
        %v1799 = vunpack.c.l.s4 1983009808
        %v1800 = vunpack.c.0.s8 %v1799
        %v1801 = vlaneseq
        %v1802 = vshrl.u32 %v1801, 7
        %v1803 = vsub.s32 %v1800, %v1802
        %v1804 = vrot.slane %v1790, %v1803
        %v1805 = vcombine.high %v1797, 0.0
        %v1807 = vunpack.c.l.s4 1934713408
        %v1808 = vunpack.c.0.s8 %v1807
        %v1809 = vlaneseq
        %v1810 = vshrl.u32 %v1809, 7
        %v1811 = vsub.s32 %v1808, %v1810
        %v1812 = vrot.slane %v1797, %v1811
        %v1814 = vunpack.c.l.s4 1934713408
        %v1815 = vunpack.c.0.s8 %v1814
        %v1816 = vlaneseq
        %v1817 = vshrl.u32 %v1816, 7
        %v1818 = vsub.s32 %v1815, %v1817
        %v1819 = vrot.slane %v1805, %v1818
        %v1820 = vcombine.high %v1804, 0.0
        %v1822 = vunpack.c.l.s4 1934713408
        %v1823 = vunpack.c.0.s8 %v1822
        %v1824 = vlaneseq
        %v1825 = vshrl.u32 %v1824, 7
        %v1826 = vsub.s32 %v1823, %v1825
        %v1827 = vrot.slane %v1804, %v1826
        %v1829 = vunpack.c.l.s4 1934713408
        %v1830 = vunpack.c.0.s8 %v1829
        %v1831 = vlaneseq
        %v1832 = vshrl.u32 %v1831, 7
        %v1833 = vsub.s32 %v1830, %v1832
        %v1834 = vrot.slane %v1820, %v1833
        %v1835 = vcombine.high %v1812, 0.0
        %v1836 = vcombine.high %v1819, 0.0
        %v1837 = vcombine.high %v1827, 0.0
        %v1838 = vcombine.high %v1834, 0.0
        %1840 = vrot.lane.b32.xlu0 %v1786, 16
        %v1841 = vpop.permute.xlu0 %1840
        %1844 = vrot.lane.b32.xlu0 %v1770, 32
        %v1845 = vpop.permute.xlu0 %1844
        %1848 = vrot.lane.b32.xlu0 %v1787, 48
        %v1849 = vpop.permute.xlu0 %1848
        %1852 = vrot.lane.b32.xlu0 %v1778, 64
        %v1853 = vpop.permute.xlu0 %1852
        %1856 = vrot.lane.b32.xlu0 %v1788, 80
        %v1857 = vpop.permute.xlu0 %1856
        %1860 = vrot.lane.b32.xlu0 %v1785, 96
        %v1861 = vpop.permute.xlu0 %1860
        %1864 = vrot.lane.b32.xlu0 %v1789, 112
        %v1865 = vpop.permute.xlu0 %1864
        %1868 = vrot.lane.b32.xlu0 %v1835, 16
        %v1869 = vpop.permute.xlu0 %1868
        %1872 = vrot.lane.b32.xlu0 %v1819, 32
        %v1873 = vpop.permute.xlu0 %1872
        %1876 = vrot.lane.b32.xlu0 %v1836, 48
        %v1877 = vpop.permute.xlu0 %1876
        %1880 = vrot.lane.b32.xlu0 %v1827, 64
        %v1881 = vpop.permute.xlu0 %1880
        %1884 = vrot.lane.b32.xlu0 %v1837, 80
        %v1885 = vpop.permute.xlu0 %1884
        %1888 = vrot.lane.b32.xlu0 %v1834, 96
        %v1889 = vpop.permute.xlu0 %1888
        %1892 = vrot.lane.b32.xlu0 %v1838, 112
        %v1893 = vpop.permute.xlu0 %1892
        %vm1895 = vcmask 130048
        %v1896 = vsel %vm1895, %v1763, %v1841
        %vm1897 = vcmask 261120
        %v1898 = vsel %vm1897, %v1896, %v1845
        %vm1899 = vcmask 392192
        %v1900 = vsel %vm1899, %v1898, %v1849
        %vm1901 = vcmask 523264
        %v1902 = vsel %vm1901, %v1900, %v1853
        %vm1903 = vcmask 654336
        %v1904 = vsel %vm1903, %v1902, %v1857
        %vm1905 = vcmask 785408
        %v1906 = vsel %vm1905, %v1904, %v1861
        %vm1907 = vcmask 916480
        %v1908 = vsel %vm1907, %v1906, %v1865
        %v1909 = vsel %vm1895, %v1812, %v1869
        %v1910 = vsel %vm1897, %v1909, %v1873
        %v1911 = vsel %vm1899, %v1910, %v1877
        %v1912 = vsel %vm1901, %v1911, %v1881
        %v1913 = vsel %vm1903, %v1912, %v1885
        %v1914 = vsel %vm1905, %v1913, %v1889
        %v1915 = vsel %vm1907, %v1914, %v1893
        %v1916 = vld [vmem:[%s123] sm:$0xff]
        %v1917 = vlaneseq
        %v1918 = vshrl.u32 %v1917, 7
        %v1919 = vsub.s32 0, %v1918
        %v1920 = vrot.slane %v1908, %v1919
        %v1921 = vlaneseq
        %v1922 = vshrl.u32 %v1921, 7
        %v1923 = vsub.s32 0, %v1922
        %v1924 = vrot.slane %v1915, %v1923
        %v1927 = vcombine.low %v1920, %v1924
        %v1929 = vmul.f32 %v1916, %v1927
        %1930 = vst [vmem:[%s141] sm:$0xff] %v1929
        %s1931 = sand.u32 %s61, 1
        %s1932 = scalar_lea.sflag [#allocation9], %s1931
        %s1933 = sand.u32 %s61, 1
        %s1934 = smul.addr %s1933, 8
        %s1935 = scalar_lea.vmem [#allocation10], %s1934
        // Predicated region
        $region29: #{tpu_custom_call.1} parent=23 // pred_check
          %p1936 = pneg %p71
        $region30: #{tpu_custom_call.1} parent=23 // pred_check_branch
          %1938 = sbr.rel (%p1936) target = $region32
        $region31: #{tpu_custom_call.1} parent=23 // pred_region
          %s1940 = ssub.s32 128, 128
          %1941 = vsyncadd %s1932, %s1940
          %s1942 = smul.addr %s27, 2
          %s1943 = smul.addr %s1942, 64
          %s1944 = scalar_lea.hbm %s3, %s1943
          %s1946 = sshll.u32 %s1935, 4
          %s1947 = int_to_ptr.vmem [resolvable:$true] %s1946
          %1949 = dma.vmem_to_hbm [thread:$0]  %s1947, 128, %s1944, %s1932
        $region32: #{tpu_custom_call.1} parent=23 // pred_fallthru
          _
      $region24: #{tpu_custom_call.1} parent=5 // pred_fallthru
        _
      %p1950 = scmp.le.s32.totalorder 2, %s22
      // Predicated region
      $region33: #{tpu_custom_call.1} parent=5 // pred_check
        %p1951 = pneg %p1950
      $region34: #{tpu_custom_call.1} parent=5 // pred_check_branch
        %1953 = sbr.rel (%p1951) target = $region36
      $region35: #{tpu_custom_call.1} parent=5 // pred_region
        %s1954 = ssub.s32 %s22, 2
        // Predicated region
        $region37: #{tpu_custom_call.1} parent=35 // pred_check
          %p1955 = pneg %p77
        $region38: #{tpu_custom_call.1} parent=35 // pred_check_branch
          %1957 = sbr.rel (%p1955) target = $region40
        $region39: #{tpu_custom_call.1} parent=35 // pred_region
          %s1958 = sand.u32 %s62, 1
          %s1959 = scalar_lea.sflag [#allocation9], %s1958
          %s1960 = sand.u32 %s62, 1
          %s1961 = smul.addr %s1960, 8
          %s1962 = scalar_lea.vmem [#allocation10], %s1961
          %1963 = dma.done %s1959, 128
        $region40: #{tpu_custom_call.1} parent=35 // pred_fallthru
          _
      $region36: #{tpu_custom_call.1} parent=5 // pred_fallthru
        _
    $region6: #{tpu_custom_call.1} parent=1 // loop_footer
      %s26 = sadd.s32 1, %s22
    $region7: #{tpu_custom_call.1} parent=1 // loop_footer_branch
      %21 = sbr.rel target = $region3
    $region8: #{tpu_custom_call.1} parent=1 // loop_exit
      _
    %1964 = vsyncpa [#allocation8], 1
    %s1965 = scalar_lea.sflag [#allocation8], 1
    %1966 = vsyncpa %s1965, 1
    %1967 = vsyncpa [#allocation9], 1
    %s1968 = scalar_lea.sflag [#allocation9], 1
    %1969 = vsyncpa %s1968, 1

</llo_original>
